<compile_context>
chip_gen: v7x
topology: tpu7x:2x2x1
jax: 0.10.0
libtpu: 0.0.40
codegen_flags: <defaults>
</compile_context>

<pallas_src>
import jax
import jax.numpy as jnp
from jax.experimental import pallas as pl
from jax.experimental.pallas import tpu as pltpu


# ----------------------------- Pallas kernels -----------------------------

def _proj_kernel(x_ref, w_ref, b_ref, o_ref):
    """Channel-major fused encoder + split flow conv.

    Output rows: [0:C)   encoder features (+ enc bias)
                 [C:C+2) A-half of flow conv  (flow(cat[f_j,f_i]) = A f_j + B f_i + b)
                 [C+2:C+4) B-half,  rest zero padding to 8-sublane multiple.
    Cin is tiny, so the contraction is Cin VPU broadcast-FMAs (no K=4 MXU use).
    """
    x = x_ref[0]                                   # (Cin, THW)  lane-dense
    w = w_ref[...]                                 # (CP, Cin)
    cin = x.shape[0]
    acc = w[:, 0:1] * x[0:1, :]                    # (CP, THW)
    for k in range(1, cin):                        # static unroll
        acc = acc + w[:, k:k + 1] * x[k:k + 1, :]
    o_ref[0] = acc + b_ref[...]                    # bias (CP, 1) broadcasts over lanes


def packed_projection(x3, w_cp, b_cp, thw_max=2048):
    """x3: (N, Cin, HW) channel-major -> (N, CP, HW) packed projections."""
    N, cin, HW = x3.shape
    CP = w_cp.shape[0]
    thw = HW if HW <= thw_max else thw_max
    hw_pad = pl.cdiv(HW, thw) * thw
    if hw_pad != HW:
        x3 = jnp.pad(x3, ((0, 0), (0, 0), (0, hw_pad - HW)))
    out = pl.pallas_call(
        _proj_kernel,
        out_shape=jax.ShapeDtypeStruct((N, CP, hw_pad), jnp.float32),
        grid=(N, hw_pad // thw),
        in_specs=[pl.BlockSpec((1, cin, thw), lambda n, h: (n, 0, h)),
                  pl.BlockSpec((CP, cin), lambda n, h: (0, 0)),
                  pl.BlockSpec((CP, 1), lambda n, h: (0, 0))],
        out_specs=pl.BlockSpec((1, CP, thw), lambda n, h: (n, 0, h)),
        compiler_params=pltpu.CompilerParams(
            dimension_semantics=("parallel", "parallel")),
    )(x3.astype(jnp.float32), w_cp, b_cp)
    return out[:, :, :HW]


def _warp_pool_kernel(g_ref, wt_ref, warped_ref, pooled_ref):
    """TP pairs per step: 4-corner bilinear combine (f32 math) + spatial mean."""
    g = g_ref[...].astype(jnp.float32)             # (TP, 4, C, HW)  bf16 stream -> f32
    wt = wt_ref[...]                               # (TP, 4, HW)     OOB-masked weights
    warped = (g[:, 0] * wt[:, 0:1]
              + g[:, 1] * wt[:, 1:2]
              + g[:, 2] * wt[:, 2:3]
              + g[:, 3] * wt[:, 3:4])              # (TP, C, HW)
    warped_ref[...] = warped.astype(warped_ref.dtype)        # bf16 writeback
    pooled_ref[...] = jnp.mean(warped, axis=2)                # (TP, C) f32


def warp_pool(g, wts, tp=8):
    """g: (Pp, 4, C, HW) bf16, wts: (Pp, 4, HW) f32 -> warped (Pp,C,HW) bf16, pooled (Pp,C) f32.

    TP pairs per grid step; for realistic sizes keep 2 x (TP*4*C*HW*2B) g buffers
    comfortably inside scoped VMEM (re-derive TP for v7x's 64 MiB physical / 32 MiB
    scoped budget, raising vmem_limit_bytes only when actually needed)."""
    Pp, _, C, HW = g.shape
    assert Pp % tp == 0
    warped, pooled = pl.pallas_call(
        _warp_pool_kernel,
        out_shape=(jax.ShapeDtypeStruct((Pp, C, HW), jnp.bfloat16),
                   jax.ShapeDtypeStruct((Pp, C), jnp.float32)),
        grid=(Pp // tp,),
        in_specs=[pl.BlockSpec((tp, 4, C, HW), lambda p: (p, 0, 0, 0)),
                  pl.BlockSpec((tp, 4, HW), lambda p: (p, 0, 0))],
        out_specs=(pl.BlockSpec((tp, C, HW), lambda p: (p, 0, 0)),
                   pl.BlockSpec((tp, C), lambda p: (p, 0))),
        compiler_params=pltpu.CompilerParams(dimension_semantics=("parallel",)),
    )(g, wts)
    return warped, pooled


def _weighted_agg_kernel(w_ref, f_ref, o_ref):
    # Weights are already per-frame normalized in the wrapper (hoisted).
    o_ref[...] = jnp.dot(w_ref[...], f_ref[...],
                         preferred_element_type=jnp.float32)


def weighted_aggregation(w_mat, f_flat, td=512):
    """w_mat: (N, Pp) normalized weights, f_flat: (Pp, D) bf16 -> (N, D) f32."""
    Nf, Pp = w_mat.shape
    _, D = f_flat.shape
    td = min(td, D)
    d_pad = pl.cdiv(D, td) * td
    if d_pad != D:
        f_flat = jnp.pad(f_flat, ((0, 0), (0, d_pad - D)))
    out = pl.pallas_call(
        _weighted_agg_kernel,
        out_shape=jax.ShapeDtypeStruct((Nf, d_pad), jnp.float32),
        grid=(d_pad // td,),
        in_specs=[pl.BlockSpec((Nf, Pp), lambda d: (0, 0)),
                  pl.BlockSpec((Pp, td), lambda d: (0, d))],
        out_specs=pl.BlockSpec((Nf, td), lambda d: (0, d)),
        compiler_params=pltpu.CompilerParams(dimension_semantics=("parallel",)),
    )(w_mat.astype(jnp.bfloat16), f_flat.astype(jnp.bfloat16))
    return out[:, :D]


# ------------------------------- JAX glue ---------------------------------

def warp_tables(flow_pairs, H, W):
    """Per-pair, per-pixel 4-corner flat indices and bilinear weights.

    Matches the PyTorch reference exactly: flo = -flow; i = floor(py+dpy),
    j = floor(px+dpx); corner (i+gy, j+gx) gets weight G[gy, gx] with
    G = [[di*dj, di*(1-dj)], [(1-di)*dj, (1-di)*(1-dj)]] -- i.e. the FLOOR
    corner gets di*dj, as in the reference.  Zero padding of grid_sample is
    emulated by clipping indices and zeroing out-of-bounds corner weights."""
    P, _, HW = flow_pairs.shape
    flo = -flow_pairs                                             # (P, 2, HW)
    hw_idx = jnp.arange(HW, dtype=jnp.int32)
    px = (hw_idx % W).astype(jnp.float32)[None, :]
    py = (hw_idx // W).astype(jnp.float32)[None, :]
    sx = px + flo[:, 0, :]
    sy = py + flo[:, 1, :]
    j0f = jnp.floor(sx)
    i0f = jnp.floor(sy)
    dj = sx - j0f
    di = sy - i0f
    i0 = i0f.astype(jnp.int32)
    j0 = j0f.astype(jnp.int32)
    corners = [(i0,     j0,     di * dj),
               (i0,     j0 + 1, di * (1.0 - dj)),
               (i0 + 1, j0,     (1.0 - di) * dj),
               (i0 + 1, j0 + 1, (1.0 - di) * (1.0 - dj))]
    idx_l, wt_l = [], []
    for ii, jj, wt in corners:
        valid = ((ii >= 0) & (ii < H) & (jj >= 0) & (jj < W)).astype(jnp.float32)
        flat = jnp.clip(ii, 0, H - 1) * W + jnp.clip(jj, 0, W - 1)
        idx_l.append(flat)
        wt_l.append(wt * valid)
    idx = jnp.stack(idx_l, axis=1)                                # (P, 4, HW) int32
    wts = jnp.stack(wt_l, axis=1)                                 # (P, 4, HW) f32
    return idx, wts


def feature_net_forward(x, params, K=10):
    """x: (N, Cin, H, W) NCHW -> list of one (N, C, H, W) aggregated feature map."""
    N, Cin, H, W = x.shape
    HW = H * W
    C = params["enc_w"].shape[0]

    # ---- channel-major fused projection (encoder + split flow conv) ----
    A_half = params["flow_w"][:, :Cin]                            # (2, Cin)
    B_half = params["flow_w"][:, Cin:]                            # (2, Cin)
    CP = pl.cdiv(C + 4, 8) * 8                                    # pad rows to sublane multiple
    w_cp = jnp.zeros((CP, Cin), jnp.float32)
    w_cp = w_cp.at[:C].set(params["enc_w"])
    w_cp = w_cp.at[C:C + 2].set(A_half)
    w_cp = w_cp.at[C + 2:C + 4].set(B_half)
    b_cp = jnp.zeros((CP, 1), jnp.float32).at[:C, 0].set(params["enc_b"])

    x3 = x.reshape(N, Cin, HW)                                    # free reshape, no transpose
    proj = packed_projection(x3, w_cp, b_cp)                      # (N, CP, HW) Pallas
    feat_chw = proj[:, :C, :]                                     # (N, C, HW)
    u = proj[:, C:C + 2, :]                                       # A @ frames[n]  (N, 2, HW)
    v = proj[:, C + 2:C + 4, :]                                   # B @ frames[n]  (N, 2, HW)

    # ---- neighbor pairs (i, j), |i - j| <= K ----
    pairs = [(i, j) for i in range(N)
             for j in range(max(0, i - K), min(N, i + K + 1))]
    P = len(pairs)
    i_arr = jnp.asarray([p[0] for p in pairs], jnp.int32)
    j_arr = jnp.asarray([p[1] for p in pairs], jnp.int32)

    TP = 8                                                        # pairs per warp grid step
    P_pad = max(2, pl.cdiv(P, TP)) * TP                           # >= 2 grid steps (v7x 2 TCs)

    # flow for every pair (flow_net output already at (H, W) -> identity interp)
    flow_pairs = u[j_arr] + v[i_arr] + params["flow_b"][None, :, None]   # (P, 2, HW)

    # ---- warp index/weight tables (pure index math, glue) ----
    idx, wts = warp_tables(flow_pairs, H, W)                      # (P, 4, HW)
    idx = jnp.pad(idx, ((0, P_pad - P), (0, 0), (0, 0)))
    wts = jnp.pad(wts, ((0, P_pad - P), (0, 0), (0, 0)))          # padded pairs: zero weights
    j_pad = jnp.pad(j_arr, (0, P_pad - P))

    # ---- 4-corner gather, O(HW*C), bf16 stream, index-broadcast only ----
    # TODO(synk): the data-dependent per-lane gather stays as an XLA
    # take_along_axis; Mosaic has no general in-kernel dynamic lane gather
    # spanning >128 lanes for this pattern.
    feat_bf = feat_chw.astype(jnp.bfloat16)
    feat_j = feat_bf[j_pad]                                       # (P_pad, C, HW)
    g = jnp.stack(
        [jnp.take_along_axis(
            feat_j,
            jnp.broadcast_to(idx[:, c4, None, :], (P_pad, C, HW)),
            axis=2)
         for c4 in range(4)], axis=1)                             # (P_pad, 4, C, HW) bf16

    # ---- batched warp-combine + spatial pooling (Pallas, TP pairs/step) ----
    warped, pooled_pair = warp_pool(g, wts, tp=TP)  # (P_pad,C,HW) bf16, (P_pad,C) f32

    # ---- embeddings as two tiny wrapper matmuls (no 16-lane kernel stores) ----
    emb_pair = pooled_pair[:P] @ params["emb_w"] + params["emb_b"]        # (P, E)
    frame_pooled = jnp.mean(feat_chw, axis=2)                             # (N, C)
    emb_frame = frame_pooled @ params["emb_w"] + params["emb_b"]          # (N, E)

    # ---- exp(cosine similarity) weights ----
    e_i = emb_frame[i_arr]                                        # (P, E)
    eps = 1e-8
    num = jnp.sum(emb_pair * e_i, axis=1)
    na = jnp.maximum(jnp.sqrt(jnp.sum(emb_pair * emb_pair, axis=1)), eps)
    nb = jnp.maximum(jnp.sqrt(jnp.sum(e_i * e_i, axis=1)), eps)
    w_pair = jnp.exp(num / (na * nb))                             # (P,)

    # ---- per-frame normalized weights (hoisted out of the agg kernel) ----
    mask = (i_arr[None, :] == jnp.arange(N, dtype=jnp.int32)[:, None]).astype(jnp.float32)
    w_mat = jnp.zeros((N, P_pad), jnp.float32).at[:, :P].set(mask * w_pair[None, :])
    w_mat = w_mat / jnp.sum(w_mat, axis=1, keepdims=True)         # self-pair guarantees > 0

    # ---- weighted temporal aggregation (Pallas tiled matmul, bf16 stream) ----
    f_flat = warped.reshape(P_pad, C * HW)
    agg = weighted_aggregation(w_mat, f_flat)                     # (N, C*HW) f32
    return [agg.reshape(N, C, H, W)]


def init_params(key, c_in=4, c_feat=8, c_emb=16):
    ks = jax.random.split(key, 6)
    s = 0.1
    return {
        "enc_w": s * jax.random.normal(ks[0], (c_feat, c_in), jnp.float32),
        "enc_b": s * jax.random.normal(ks[1], (c_feat,), jnp.float32),
        "flow_w": s * jax.random.normal(ks[2], (2, 2 * c_in), jnp.float32),
        "flow_b": s * jax.random.normal(ks[3], (2,), jnp.float32),
        "emb_w": s * jax.random.normal(ks[4], (c_feat, c_emb), jnp.float32),
        "emb_b": s * jax.random.normal(ks[5], (c_emb,), jnp.float32),
    }


if __name__ == "__main__":
    key = jax.random.PRNGKey(0)
    kx, kp = jax.random.split(key)
    # x: N=2 frames, 4 channels, 16x16 spatial (NCHW, matching the PyTorch module)
    x = jax.random.normal(kx, (2, 4, 16, 16), jnp.float32)
    params = init_params(kp)

    fwd = jax.jit(feature_net_forward)
    out_list = fwd(x, params)
    for o in out_list:
        jax.block_until_ready(o)
    assert out_list[0].shape == (2, 8, 16, 16)
    print("KERNEL_OK")
</pallas_src>

<mosaic_0001>
module attributes {stable_mosaic.version = 11 : i64} {
  func.func private @main(%arg0: i32) attributes {dimension_semantics = [#tpu.dimension_semantics<core_parallel>], iteration_bounds = array<i64: 2>, tpu.core_type = #tpu.core_type<sc_scalar_subcore>, window_params = []} {
    return
  }
}

module attributes {stable_mosaic.version = 11 : i64} {
  func.func private @main(%arg0: i32) attributes {dimension_semantics = [#tpu.dimension_semantics<core_parallel>], iteration_bounds = array<i64: 2>, tpu.core_type = #tpu.core_type<sc_scalar_subcore>, window_params = []} {
    return
  }
}

module attributes {stable_mosaic.version = 11 : i64} {
  func.func @_proj_kernel(%arg0: i32, %arg1: i32, %arg2: memref<1x4x256xf32, #tpu.memory_space<vmem>>, %arg3: memref<16x4xf32, #tpu.memory_space<vmem>>, %arg4: memref<16x1xf32, #tpu.memory_space<vmem>>, %arg5: memref<1x16x256xf32, #tpu.memory_space<vmem>>) attributes {dimension_semantics = [#tpu.dimension_semantics<parallel>, #tpu.dimension_semantics<parallel>], iteration_bounds = array<i64: 2, 1>, scalar_prefetch = 0 : i64, scratch_operands = 0 : i64, tpu.core_type = #tpu.core_type<tc>, window_params = [{transform_indices = @transform_0, window_bounds = array<i64: 1, 4, 256>}, {pipeline_mode = #tpu.pipeline_mode<synchronous>, transform_indices = @transform_1, window_bounds = array<i64: 16, 4>}, {pipeline_mode = #tpu.pipeline_mode<synchronous>, transform_indices = @transform_2, window_bounds = array<i64: 16, 1>}, {transform_indices = @transform_3, window_bounds = array<i64: 1, 16, 256>}]} {
    %c0 = arith.constant 0 : index
    %c0_0 = arith.constant 0 : index
    %c0_1 = arith.constant 0 : index
    %0 = vector.load %arg2[%c0, %c0_0, %c0_1] : memref<1x4x256xf32, #tpu.memory_space<vmem>>, vector<1x4x256xf32>
    %1 = vector.shape_cast %0 : vector<1x4x256xf32> to vector<4x256xf32>
    %c0_2 = arith.constant 0 : index
    %c0_3 = arith.constant 0 : index
    %2 = vector.load %arg3[%c0_2, %c0_3] : memref<16x4xf32, #tpu.memory_space<vmem>>, vector<16x4xf32>
    %3 = vector.extract_strided_slice %2 {offsets = [0, 0], sizes = [16, 1], strides = [1, 1]} : vector<16x4xf32> to vector<16x1xf32>
    %4 = vector.extract_strided_slice %1 {offsets = [0, 0], sizes = [1, 256], strides = [1, 1]} : vector<4x256xf32> to vector<1x256xf32>
    %5 = vector.broadcast %3 : vector<16x1xf32> to vector<16x256xf32>
    %6 = vector.broadcast %4 : vector<1x256xf32> to vector<16x256xf32>
    %7 = arith.mulf %5, %6 : vector<16x256xf32>
    %8 = vector.extract_strided_slice %2 {offsets = [0, 1], sizes = [16, 1], strides = [1, 1]} : vector<16x4xf32> to vector<16x1xf32>
    %9 = vector.extract_strided_slice %1 {offsets = [1, 0], sizes = [1, 256], strides = [1, 1]} : vector<4x256xf32> to vector<1x256xf32>
    %10 = vector.broadcast %8 : vector<16x1xf32> to vector<16x256xf32>
    %11 = vector.broadcast %9 : vector<1x256xf32> to vector<16x256xf32>
    %12 = arith.mulf %10, %11 : vector<16x256xf32>
    %13 = arith.addf %7, %12 : vector<16x256xf32>
    %14 = vector.extract_strided_slice %2 {offsets = [0, 2], sizes = [16, 1], strides = [1, 1]} : vector<16x4xf32> to vector<16x1xf32>
    %15 = vector.extract_strided_slice %1 {offsets = [2, 0], sizes = [1, 256], strides = [1, 1]} : vector<4x256xf32> to vector<1x256xf32>
    %16 = vector.broadcast %14 : vector<16x1xf32> to vector<16x256xf32>
    %17 = vector.broadcast %15 : vector<1x256xf32> to vector<16x256xf32>
    %18 = arith.mulf %16, %17 : vector<16x256xf32>
    %19 = arith.addf %13, %18 : vector<16x256xf32>
    %20 = vector.extract_strided_slice %2 {offsets = [0, 3], sizes = [16, 1], strides = [1, 1]} : vector<16x4xf32> to vector<16x1xf32>
    %21 = vector.extract_strided_slice %1 {offsets = [3, 0], sizes = [1, 256], strides = [1, 1]} : vector<4x256xf32> to vector<1x256xf32>
    %22 = vector.broadcast %20 : vector<16x1xf32> to vector<16x256xf32>
    %23 = vector.broadcast %21 : vector<1x256xf32> to vector<16x256xf32>
    %24 = arith.mulf %22, %23 : vector<16x256xf32>
    %25 = arith.addf %19, %24 : vector<16x256xf32>
    %c0_4 = arith.constant 0 : index
    %c0_5 = arith.constant 0 : index
    %26 = vector.load %arg4[%c0_4, %c0_5] : memref<16x1xf32, #tpu.memory_space<vmem>>, vector<16x1xf32>
    %27 = vector.broadcast %26 : vector<16x1xf32> to vector<16x256xf32>
    %28 = arith.addf %25, %27 : vector<16x256xf32>
    %c0_6 = arith.constant 0 : index
    %c0_7 = arith.constant 0 : index
    %c0_8 = arith.constant 0 : index
    %29 = vector.load %arg5[%c0_6, %c0_7, %c0_8] : memref<1x16x256xf32, #tpu.memory_space<vmem>>, vector<1x16x256xf32>
    %30 = vector.shape_cast %29 : vector<1x16x256xf32> to vector<16x256xf32>
    %31 = vector.shape_cast %28 : vector<16x256xf32> to vector<1x16x256xf32>
    tpu.vector_store %arg5[%c0_6, %c0_7, %c0_8], %31 {strides = array<i32>} : memref<1x16x256xf32, #tpu.memory_space<vmem>>, vector<1x16x256xf32>,
    return
  }
  func.func @transform_0(%arg0: i32, %arg1: i32) -> (i32, i32, i32) {
    %c0_i32 = arith.constant 0 : i32
    %c0_i32_0 = arith.constant 0 : i32
    return %arg0, %c0_i32, %arg1 : i32, i32, i32
  }
  func.func @transform_1(%arg0: i32, %arg1: i32) -> (i32, i32) {
    %c0_i32 = arith.constant 0 : i32
    %c0_i32_0 = arith.constant 0 : i32
    %c0_i32_1 = arith.constant 0 : i32
    return %c0_i32, %c0_i32_0 : i32, i32
  }
  func.func @transform_2(%arg0: i32, %arg1: i32) -> (i32, i32) {
    %c0_i32 = arith.constant 0 : i32
    %c0_i32_0 = arith.constant 0 : i32
    %c0_i32_1 = arith.constant 0 : i32
    return %c0_i32, %c0_i32_0 : i32, i32
  }
  func.func @transform_3(%arg0: i32, %arg1: i32) -> (i32, i32, i32) {
    %c0_i32 = arith.constant 0 : i32
    %c0_i32_0 = arith.constant 0 : i32
    return %arg0, %c0_i32, %arg1 : i32, i32, i32
  }
}

module attributes {stable_mosaic.version = 11 : i64} {
  func.func @_warp_pool_kernel(%arg0: i32, %arg1: memref<8x4x8x256xbf16, #tpu.memory_space<vmem>>, %arg2: memref<8x4x256xf32, #tpu.memory_space<vmem>>, %arg3: memref<8x8x256xbf16, #tpu.memory_space<vmem>>, %arg4: memref<8x8xf32, #tpu.memory_space<vmem>>) attributes {dimension_semantics = [#tpu.dimension_semantics<parallel>], iteration_bounds = array<i64: 2>, scalar_prefetch = 0 : i64, scratch_operands = 0 : i64, tpu.core_type = #tpu.core_type<tc>, window_params = [{transform_indices = @transform_0, window_bounds = array<i64: 8, 4, 8, 256>}, {transform_indices = @transform_1, window_bounds = array<i64: 8, 4, 256>}, {transform_indices = @transform_2, window_bounds = array<i64: 8, 8, 256>}, {transform_indices = @transform_3, window_bounds = array<i64: 8, 8>}]} {
    %c0 = arith.constant 0 : index
    %c0_0 = arith.constant 0 : index
    %c0_1 = arith.constant 0 : index
    %c0_2 = arith.constant 0 : index
    %0 = vector.load %arg1[%c0, %c0_0, %c0_1, %c0_2] : memref<8x4x8x256xbf16, #tpu.memory_space<vmem>>, vector<8x4x8x256xbf16>
    %1 = arith.extf %0 : vector<8x4x8x256xbf16> to vector<8x4x8x256xf32>
    %c0_3 = arith.constant 0 : index
    %c0_4 = arith.constant 0 : index
    %c0_5 = arith.constant 0 : index
    %2 = vector.load %arg2[%c0_3, %c0_4, %c0_5] : memref<8x4x256xf32, #tpu.memory_space<vmem>>, vector<8x4x256xf32>
    %3 = vector.extract_strided_slice %1 {offsets = [0, 0, 0, 0], sizes = [8, 1, 8, 256], strides = [1, 1, 1, 1]} : vector<8x4x8x256xf32> to vector<8x1x8x256xf32>
    %4 = vector.shape_cast %3 : vector<8x1x8x256xf32> to vector<8x8x256xf32>
    %5 = vector.extract_strided_slice %2 {offsets = [0, 0, 0], sizes = [8, 1, 256], strides = [1, 1, 1]} : vector<8x4x256xf32> to vector<8x1x256xf32>
    %6 = vector.broadcast %5 : vector<8x1x256xf32> to vector<8x8x256xf32>
    %7 = arith.mulf %4, %6 : vector<8x8x256xf32>
    %8 = vector.extract_strided_slice %1 {offsets = [0, 1, 0, 0], sizes = [8, 1, 8, 256], strides = [1, 1, 1, 1]} : vector<8x4x8x256xf32> to vector<8x1x8x256xf32>
    %9 = vector.shape_cast %8 : vector<8x1x8x256xf32> to vector<8x8x256xf32>
    %10 = vector.extract_strided_slice %2 {offsets = [0, 1, 0], sizes = [8, 1, 256], strides = [1, 1, 1]} : vector<8x4x256xf32> to vector<8x1x256xf32>
    %11 = vector.broadcast %10 : vector<8x1x256xf32> to vector<8x8x256xf32>
    %12 = arith.mulf %9, %11 : vector<8x8x256xf32>
    %13 = arith.addf %7, %12 : vector<8x8x256xf32>
    %14 = vector.extract_strided_slice %1 {offsets = [0, 2, 0, 0], sizes = [8, 1, 8, 256], strides = [1, 1, 1, 1]} : vector<8x4x8x256xf32> to vector<8x1x8x256xf32>
    %15 = vector.shape_cast %14 : vector<8x1x8x256xf32> to vector<8x8x256xf32>
    %16 = vector.extract_strided_slice %2 {offsets = [0, 2, 0], sizes = [8, 1, 256], strides = [1, 1, 1]} : vector<8x4x256xf32> to vector<8x1x256xf32>
    %17 = vector.broadcast %16 : vector<8x1x256xf32> to vector<8x8x256xf32>
    %18 = arith.mulf %15, %17 : vector<8x8x256xf32>
    %19 = arith.addf %13, %18 : vector<8x8x256xf32>
    %20 = vector.extract_strided_slice %1 {offsets = [0, 3, 0, 0], sizes = [8, 1, 8, 256], strides = [1, 1, 1, 1]} : vector<8x4x8x256xf32> to vector<8x1x8x256xf32>
    %21 = vector.shape_cast %20 : vector<8x1x8x256xf32> to vector<8x8x256xf32>
    %22 = vector.extract_strided_slice %2 {offsets = [0, 3, 0], sizes = [8, 1, 256], strides = [1, 1, 1]} : vector<8x4x256xf32> to vector<8x1x256xf32>
    %23 = vector.broadcast %22 : vector<8x1x256xf32> to vector<8x8x256xf32>
    %24 = arith.mulf %21, %23 : vector<8x8x256xf32>
    %25 = arith.addf %19, %24 : vector<8x8x256xf32>
    %26 = arith.truncf %25 : vector<8x8x256xf32> to vector<8x8x256xbf16>
    %c0_6 = arith.constant 0 : index
    %c0_7 = arith.constant 0 : index
    %c0_8 = arith.constant 0 : index
    %27 = vector.load %arg3[%c0_6, %c0_7, %c0_8] : memref<8x8x256xbf16, #tpu.memory_space<vmem>>, vector<8x8x256xbf16>
    tpu.vector_store %arg3[%c0_6, %c0_7, %c0_8], %26 {strides = array<i32>} : memref<8x8x256xbf16, #tpu.memory_space<vmem>>, vector<8x8x256xbf16>,
    %cst = arith.constant dense<0.000000e+00> : vector<8x8xf32>
    %28 = vector.multi_reduction <add>, %25, %cst [2] : vector<8x8x256xf32> to vector<8x8xf32>
    %cst_9 = arith.constant 2.560000e+02 : f32
    %29 = vector.broadcast %cst_9 : f32 to vector<8x8xf32>
    %30 = arith.divf %28, %29 : vector<8x8xf32>
    %c0_10 = arith.constant 0 : index
    %c0_11 = arith.constant 0 : index
    %31 = vector.load %arg4[%c0_10, %c0_11] : memref<8x8xf32, #tpu.memory_space<vmem>>, vector<8x8xf32>
    tpu.vector_store %arg4[%c0_10, %c0_11], %30 {strides = array<i32>} : memref<8x8xf32, #tpu.memory_space<vmem>>, vector<8x8xf32>,
    return
  }
  func.func @transform_0(%arg0: i32) -> (i32, i32, i32, i32) {
    %c0_i32 = arith.constant 0 : i32
    %c0_i32_0 = arith.constant 0 : i32
    %c0_i32_1 = arith.constant 0 : i32
    %c0_i32_2 = arith.constant 0 : i32
    return %arg0, %c0_i32, %c0_i32_0, %c0_i32_1 : i32, i32, i32, i32
  }
  func.func @transform_1(%arg0: i32) -> (i32, i32, i32) {
    %c0_i32 = arith.constant 0 : i32
    %c0_i32_0 = arith.constant 0 : i32
    %c0_i32_1 = arith.constant 0 : i32
    return %arg0, %c0_i32, %c0_i32_0 : i32, i32, i32
  }
  func.func @transform_2(%arg0: i32) -> (i32, i32, i32) {
    %c0_i32 = arith.constant 0 : i32
    %c0_i32_0 = arith.constant 0 : i32
    %c0_i32_1 = arith.constant 0 : i32
    return %arg0, %c0_i32, %c0_i32_0 : i32, i32, i32
  }
  func.func @transform_3(%arg0: i32) -> (i32, i32) {
    %c0_i32 = arith.constant 0 : i32
    %c0_i32_0 = arith.constant 0 : i32
    return %arg0, %c0_i32 : i32, i32
  }
}

module attributes {stable_mosaic.version = 11 : i64} {
  func.func @_weighted_agg_kernel(%arg0: i32, %arg1: memref<2x16xbf16, #tpu.memory_space<vmem>>, %arg2: memref<16x512xbf16, #tpu.memory_space<vmem>>, %arg3: memref<2x512xf32, #tpu.memory_space<vmem>>) attributes {dimension_semantics = [#tpu.dimension_semantics<parallel>], iteration_bounds = array<i64: 4>, scalar_prefetch = 0 : i64, scratch_operands = 0 : i64, tpu.core_type = #tpu.core_type<tc>, window_params = [{pipeline_mode = #tpu.pipeline_mode<synchronous>, transform_indices = @transform_0, window_bounds = array<i64: 2, 16>}, {transform_indices = @transform_1, window_bounds = array<i64: 16, 512>}, {transform_indices = @transform_2, window_bounds = array<i64: 2, 512>}]} {
    %c0 = arith.constant 0 : index
    %c0_0 = arith.constant 0 : index
    %0 = vector.load %arg1[%c0, %c0_0] : memref<2x16xbf16, #tpu.memory_space<vmem>>, vector<2x16xbf16>
    %c0_1 = arith.constant 0 : index
    %c0_2 = arith.constant 0 : index
    %1 = vector.load %arg2[%c0_1, %c0_2] : memref<16x512xbf16, #tpu.memory_space<vmem>>, vector<16x512xbf16>
    %cst = arith.constant dense<0.000000e+00> : vector<2x512xf32>
    %2 = tpu.matmul %0, %1, %cst {dimension_numbers = #tpu.dot_dimension_numbers<[1], [0], [0], [1], [0, 0, 1, 1], [], []>} : vector<2x16xbf16>, vector<16x512xbf16>, vector<2x512xf32> -> vector<2x512xf32>
    %c0_3 = arith.constant 0 : index
    %c0_4 = arith.constant 0 : index
    %3 = vector.load %arg3[%c0_3, %c0_4] : memref<2x512xf32, #tpu.memory_space<vmem>>, vector<2x512xf32>
    tpu.vector_store %arg3[%c0_3, %c0_4], %2 {strides = array<i32>} : memref<2x512xf32, #tpu.memory_space<vmem>>, vector<2x512xf32>,
    return
  }
  func.func @transform_0(%arg0: i32) -> (i32, i32) {
    %c0_i32 = arith.constant 0 : i32
    %c0_i32_0 = arith.constant 0 : i32
    %c0_i32_1 = arith.constant 0 : i32
    return %c0_i32, %c0_i32_0 : i32, i32
  }
  func.func @transform_1(%arg0: i32) -> (i32, i32) {
    %c0_i32 = arith.constant 0 : i32
    %c0_i32_0 = arith.constant 0 : i32
    return %c0_i32, %arg0 : i32, i32
  }
  func.func @transform_2(%arg0: i32) -> (i32, i32) {
    %c0_i32 = arith.constant 0 : i32
    %c0_i32_0 = arith.constant 0 : i32
    return %c0_i32, %arg0 : i32, i32
  }
}

</mosaic_0001>

<llo_original>
// kernel: feature_net_forward.3
$region0: #{feature_net_forward.3}
  #allocation0 [shape = 'u32[]', space=smem, size = 0x4, offset = 0x4, fixed_abs, tag = 'smem constant byte address 0x4 - core index']
  #allocation1 [shape = 'u32[144,128]{1,0:T(1,128)}', space=vmem, size = 0x12000, scoped, tag = 'internal scratch']
  %s0 = inlined_call_operand.vmem [shape: f32[2,4,256], index: 0, kind: input, shape index: {}]
  %s1 = inlined_call_operand.vmem [shape: f32[16,4], index: 1, kind: input, shape index: {}]
  %s2 = inlined_call_operand.vmem [shape: f32[16,1], index: 2, kind: input, shape index: {}]
  %s3 = inlined_call_operand.vmem [shape: f32[2,16,256], index: 3, kind: output, shape index: {}]
  %s4 = sld [smem:[#allocation0]]
  $region45: #{feature_net_forward.3} parent=0
    _
  %s6 = ssub.s32 1, %s4
  %s7 = scalar_select 0, %s6, %s4
  loop: start=0, step=1, limit=4
  $region2: #{feature_net_forward.3} parent=0 // loop_pre_header
    _
  $region3: #{feature_net_forward.3} parent=0 // loop_header
    %s9 = sphi 0, %s13
    %p10 = scmp.ge.s32.totalorder %s9, 4
    %s16 = sphi 0, %s28
    %s17 = sphi 0, %s24
    %s18 = sphi 0, %s16
    %s19 = sphi 0, %s17
    %s20 = sphi 0, %s18
    %s21 = sphi 0, %s19
    %s33 = sphi 0, %s35
    %s36 = sphi 0, %s33
    %s37 = sphi 0, %s36
    %s53 = sphi 0, %s37
    %s57 = sphi 0, %s57
    %s59 = sphi 0, %s57
    %s60 = sphi 0, %s59
    %s74 = sphi 0, %s60
    %s78 = sphi 0, %s78
    %s80 = sphi 0, %s78
    %s81 = sphi 0, %s80
    %s95 = sphi 0, %s81
    %s103 = sphi 0, %s105
    %s106 = sphi 0, %s103
    %s107 = sphi 0, %s106
    %s123 = sphi 0, %s107
  $region4: #{feature_net_forward.3} parent=0 // loop_header_branch
    %12 = sbr.rel (%p10) target = $region8
  $region5: #{feature_net_forward.3} parent=0 // loop_body
    %s14 = ssub.s32 %s9, 1
    %s15 = ssub.s32 %s9, 2
    %s22 = sadd.s32 1, %s17
    %p23 = scmp.ge.s32.totalorder %s22, 1
    %s24 = scalar_select %p23, 0, %s22
    %s25 = sadd.s32 1, %s16
    %s26 = scalar_select %p23, %s25, %s16
    %p27 = scmp.ge.s32.totalorder %s26, 2
    %s28 = scalar_select %p27, 0, %s26
    %s29 = ssub.s32 %s16, %s28
    %s30 = ssub.s32 %s17, %s24
    %s31 = sor.u32 %s29, %s30
    %p32 = scmp.eq.s32.totalorder %s31, 0
    %s34 = sadd.s32 %s33, 1
    %s35 = scalar_select %p32, %s33, %s34
    %p38 = pneg %p32
    %p39 = scmp.eq.s32.totalorder %s9, 1
    %p40 = por %p38, %p39
    %p41 = scmp.ne.s32.totalorder %s33, %s36
    %p42 = scmp.eq.s32.totalorder %s9, 0
    %p43 = por %p41, %p42
    %p44 = scmp.ne.s32.totalorder %s33, %s36
    %p45 = scmp.eq.s32.totalorder %s14, 1
    %p46 = por %p44, %p45
    %p47 = scmp.ne.s32.totalorder %s36, %s37
    %p48 = scmp.eq.s32.totalorder %s14, 0
    %p49 = por %p47, %p48
    %p50 = scmp.ne.s32.totalorder %s36, %s37
    %p51 = scmp.eq.s32.totalorder %s15, 1
    %p52 = por %p50, %p51
    %p54 = scmp.ne.s32.totalorder %s37, %s53
    %p55 = scmp.eq.s32.totalorder %s15, 0
    %p56 = por %p54, %p55
    %s58 = sadd.s32 %s57, 1
    %p61 = scmp.eq.s32.totalorder %s9, 1
    %p62 = scmp.ne.s32.totalorder %s57, %s59
    %p63 = scmp.eq.s32.totalorder %s9, 0
    %p64 = por %p62, %p63
    %p65 = scmp.ne.s32.totalorder %s57, %s59
    %p66 = scmp.eq.s32.totalorder %s14, 1
    %p67 = por %p65, %p66
    %p68 = scmp.ne.s32.totalorder %s59, %s60
    %p69 = scmp.eq.s32.totalorder %s14, 0
    %p70 = por %p68, %p69
    %p71 = scmp.ne.s32.totalorder %s59, %s60
    %p72 = scmp.eq.s32.totalorder %s15, 1
    %p73 = por %p71, %p72
    %p75 = scmp.ne.s32.totalorder %s60, %s74
    %p76 = scmp.eq.s32.totalorder %s15, 0
    %p77 = por %p75, %p76
    %s79 = sadd.s32 %s78, 1
    %p82 = scmp.eq.s32.totalorder %s9, 1
    %p83 = scmp.ne.s32.totalorder %s78, %s80
    %p84 = scmp.eq.s32.totalorder %s9, 0
    %p85 = por %p83, %p84
    %p86 = scmp.ne.s32.totalorder %s78, %s80
    %p87 = scmp.eq.s32.totalorder %s14, 1
    %p88 = por %p86, %p87
    %p89 = scmp.ne.s32.totalorder %s80, %s81
    %p90 = scmp.eq.s32.totalorder %s14, 0
    %p91 = por %p89, %p90
    %p92 = scmp.ne.s32.totalorder %s80, %s81
    %p93 = scmp.eq.s32.totalorder %s15, 1
    %p94 = por %p92, %p93
    %p96 = scmp.ne.s32.totalorder %s81, %s95
    %p97 = scmp.eq.s32.totalorder %s15, 0
    %p98 = por %p96, %p97
    %s99 = ssub.s32 %s16, %s28
    %s100 = ssub.s32 %s17, %s24
    %s101 = sor.u32 %s99, %s100
    %p102 = scmp.eq.s32.totalorder %s101, 0
    %s104 = sadd.s32 %s103, 1
    %s105 = scalar_select %p102, %s103, %s104
    %p108 = pneg %p102
    %p109 = scmp.eq.s32.totalorder %s9, 1
    %p110 = por %p108, %p109
    %p111 = scmp.ne.s32.totalorder %s103, %s106
    %p112 = scmp.eq.s32.totalorder %s9, 0
    %p113 = por %p111, %p112
    %p114 = scmp.ne.s32.totalorder %s103, %s106
    %p115 = scmp.eq.s32.totalorder %s14, 1
    %p116 = por %p114, %p115
    %p117 = scmp.ne.s32.totalorder %s106, %s107
    %p118 = scmp.eq.s32.totalorder %s14, 0
    %p119 = por %p117, %p118
    %p120 = scmp.ne.s32.totalorder %s106, %s107
    %p121 = scmp.eq.s32.totalorder %s15, 1
    %p122 = por %p120, %p121
    %p124 = scmp.ne.s32.totalorder %s107, %s123
    %p125 = scmp.eq.s32.totalorder %s15, 0
    %p126 = por %p124, %p125
    %p127 = scmp.le.s32.totalorder 1, %s9
    %p128 = scmp.lt.s32.totalorder %s9, 3
    %p129 = pnand %p127, %p128
    %p130 = pneg %p129
    // Predicated region
    $region9: #{feature_net_forward.3} parent=5 // pred_check
      _
    $region10: #{feature_net_forward.3} parent=5 // pred_check_branch
      %132 = sbr.rel (%p129) target = $region12
    $region11: #{feature_net_forward.3} parent=5 // pred_region
      %s133 = ssub.s32 %s9, 1
      // Predicated region
      $region13: #{feature_net_forward.3} parent=11 // pred_check
        %p134 = pneg %p70
      $region14: #{feature_net_forward.3} parent=11 // pred_check_branch
        %136 = sbr.rel (%p134) target = $region16
      $region15: #{feature_net_forward.3} parent=11 // pred_region
        _
      $region16: #{feature_net_forward.3} parent=11 // pred_fallthru
        _
      // Predicated region
      $region17: #{feature_net_forward.3} parent=11 // pred_check
        %p137 = pneg %p91
      $region18: #{feature_net_forward.3} parent=11 // pred_check_branch
        %139 = sbr.rel (%p137) target = $region20
      $region19: #{feature_net_forward.3} parent=11 // pred_region
        _
      $region20: #{feature_net_forward.3} parent=11 // pred_fallthru
        _
    $region12: #{feature_net_forward.3} parent=5 // pred_fallthru
      _
    %p140 = scmp.lt.s32.totalorder %s9, 2
    // Predicated region
    $region21: #{feature_net_forward.3} parent=5 // pred_check
      %p141 = pneg %p140
    $region22: #{feature_net_forward.3} parent=5 // pred_check_branch
      %143 = sbr.rel (%p141) target = $region24
    $region23: #{feature_net_forward.3} parent=5 // pred_region
      // Predicated region
      $region25: #{feature_net_forward.3} parent=23 // pred_check
        %p144 = pneg %p43
      $region26: #{feature_net_forward.3} parent=23 // pred_check_branch
        %146 = sbr.rel (%p144) target = $region28
      $region27: #{feature_net_forward.3} parent=23 // pred_region
        %s147 = smul.u32 2, %s17
        %p148 = scmp.lt.s32.totalorder %s16, 1
        %s149 = scalar_select %p148, %s16, 1
        %p150 = scmp.lt.s32.totalorder %s147, 1
        %s151 = scalar_select %p150, %s147, 1
        %s152 = smul.addr %s149, 2
        %s153 = sadd.s32 %s151, %s152
        %s154 = smul.addr %s153, 4
        %s155 = scalar_lea.vmem %s0, %s154
        %s156 = smul.u32 2, %s17
      $region28: #{feature_net_forward.3} parent=23 // pred_fallthru
        _
    $region24: #{feature_net_forward.3} parent=5 // pred_fallthru
      _
    %p157 = scmp.le.s32.totalorder 1, %s9
    %p158 = scmp.lt.s32.totalorder %s9, 3
    %p159 = pnand %p157, %p158
    %p160 = pneg %p159
    // Predicated region
    $region29: #{feature_net_forward.3} parent=5 // pred_check
      _
    $region30: #{feature_net_forward.3} parent=5 // pred_check_branch
      %162 = sbr.rel (%p159) target = $region32
    $region31: #{feature_net_forward.3} parent=5 // pred_region
      %s163 = ssub.s32 %s9, 1
      %s164 = smul.u32 2, %s19
      %p165 = scmp.lt.s32.totalorder %s18, 1
      %s166 = scalar_select %p165, %s18, 1
      %p167 = scmp.lt.s32.totalorder %s164, 1
      %s168 = scalar_select %p167, %s164, 1
      %s169 = smul.addr %s166, 2
      %s170 = sadd.s32 %s168, %s169
      %s171 = smul.addr %s170, 4
      %s172 = scalar_lea.vmem %s0, %s171
      %p173 = pneg %p49
      %p174 = pneg %p46
      %p175 = pneg %p70
      %p176 = pneg %p67
      %p177 = pneg %p91
      %p178 = pneg %p88
      %p179 = pneg %p119
      %p180 = pneg %p116
      %s181 = smul.u32 2, %s19
      %p182 = scmp.lt.s32.totalorder %s18, 1
      %s183 = scalar_select %p182, %s18, 1
      %p184 = scmp.lt.s32.totalorder %s181, 1
      %s185 = scalar_select %p184, %s181, 1
      %s186 = smul.addr %s183, 4
      %s187 = sadd.s32 %s185, %s186
      %s188 = smul.addr %s187, 8
      %s189 = scalar_lea.vmem %s3, %s188
      %s190 = smul.u32 2, %s19
      %p191 = scmp.lt.s32.totalorder %s18, 1
      %s192 = scalar_select %p191, %s18, 1
      %p193 = scmp.lt.s32.totalorder %s190, 1
      %s194 = scalar_select %p193, %s190, 1
      %s195 = smul.addr %s192, 2
      %s196 = sadd.s32 %s194, %s195
      %s197 = smul.addr %s196, 4
      %s198 = scalar_lea.vmem %s0, %s197
      %s199 = smul.u32 2, %s19
      %s200 = smul.u32 2, %s19
      %p201 = scmp.lt.s32.totalorder %s18, 1
      %s202 = scalar_select %p201, %s18, 1
      %p203 = scmp.lt.s32.totalorder %s200, 1
      %s204 = scalar_select %p203, %s200, 1
      %s205 = smul.addr %s202, 4
      %s206 = sadd.s32 %s204, %s205
      %s207 = smul.addr %s206, 8
      %s208 = scalar_lea.vmem %s3, %s207
      %s209 = smul.u32 2, %s19
      %v210 = vld [vmem:[%s198] sm:$0xff]
      %v211 = vld [vmem:[%s1] sm:$0xff]
      %v212 = vld [vmem:[%s1 + $0x8] sm:$0xff]
      %214 = vset.pattern.permute.xlu0 0
      %215 = vperm.xlu0 %214, %v211
      %v216 = vpop.permute.xlu0 %215
      %219 = vset.pattern.permute.xlu0 0
      %220 = vperm.xlu0 %219, %v212
      %v221 = vpop.permute.xlu0 %220
      %v224 = vlaneseq
      %v225 = vshrl.u32 %v224, 7
      %v226 = vsub.s32 0, %v225
      %v227 = vrot.slane %v210, %v226
      %v228 = vlaneseq
      %v229 = vshrl.u32 %v228, 7
      %v230 = vsub.s32 4, %v229
      %v231 = vrot.slane %v210, %v230
      %v234 = vlaneseq
      %v235 = vshrl.u32 %v234, 7
      %v236 = vsub.s32 0, %v235
      %v237 = vrot.slane %v227, %v236
      %v238 = vlaneseq
      %v239 = vshrl.u32 %v238, 7
      %v240 = vsub.s32 0, %v239
      %v241 = vrot.slane %v231, %v240
      %v242 = vmul.f32 %v216, %v237
      %v243 = vmul.f32 %v216, %v241
      %v244 = vmul.f32 %v221, %v237
      %v245 = vmul.f32 %v221, %v241
      %246 = vset.pattern.permute.xlu0 1
      %247 = vperm.xlu0 %246, %v211
      %v248 = vpop.permute.xlu0 %247
      %250 = vset.pattern.permute.xlu0 1
      %251 = vperm.xlu0 %250, %v212
      %v252 = vpop.permute.xlu0 %251
      %v254 = vlaneseq
      %v255 = vshrl.u32 %v254, 7
      %v256 = vsub.s32 1, %v255
      %v257 = vrot.slane %v210, %v256
      %v258 = vlaneseq
      %v259 = vshrl.u32 %v258, 7
      %v260 = vsub.s32 5, %v259
      %v261 = vrot.slane %v210, %v260
      %v264 = vlaneseq
      %v265 = vshrl.u32 %v264, 7
      %v266 = vsub.s32 1, %v265
      %v267 = vrot.slane %v257, %v266
      %v268 = vlaneseq
      %v269 = vshrl.u32 %v268, 7
      %v270 = vsub.s32 1, %v269
      %v271 = vrot.slane %v261, %v270
      %v272 = vmul.f32 %v248, %v267
      %v273 = vmul.f32 %v248, %v271
      %v274 = vmul.f32 %v252, %v267
      %v275 = vmul.f32 %v252, %v271
      %v276 = vadd.f32 %v242, %v272
      %v277 = vadd.f32 %v243, %v273
      %v278 = vadd.f32 %v244, %v274
      %v279 = vadd.f32 %v245, %v275
      %280 = vset.pattern.permute.xlu0 2
      %281 = vperm.xlu0 %280, %v211
      %v282 = vpop.permute.xlu0 %281
      %284 = vset.pattern.permute.xlu0 2
      %285 = vperm.xlu0 %284, %v212
      %v286 = vpop.permute.xlu0 %285
      %v288 = vlaneseq
      %v289 = vshrl.u32 %v288, 7
      %v290 = vsub.s32 2, %v289
      %v291 = vrot.slane %v210, %v290
      %v292 = vlaneseq
      %v293 = vshrl.u32 %v292, 7
      %v294 = vsub.s32 6, %v293
      %v295 = vrot.slane %v210, %v294
      %v298 = vlaneseq
      %v299 = vshrl.u32 %v298, 7
      %v300 = vsub.s32 2, %v299
      %v301 = vrot.slane %v291, %v300
      %v302 = vlaneseq
      %v303 = vshrl.u32 %v302, 7
      %v304 = vsub.s32 2, %v303
      %v305 = vrot.slane %v295, %v304
      %v306 = vmul.f32 %v282, %v301
      %v307 = vmul.f32 %v282, %v305
      %v308 = vmul.f32 %v286, %v301
      %v309 = vmul.f32 %v286, %v305
      %v310 = vadd.f32 %v276, %v306
      %v311 = vadd.f32 %v277, %v307
      %v312 = vadd.f32 %v278, %v308
      %v313 = vadd.f32 %v279, %v309
      %314 = vset.pattern.permute.xlu0 3
      %315 = vperm.xlu0 %314, %v211
      %v316 = vpop.permute.xlu0 %315
      %318 = vset.pattern.permute.xlu0 3
      %319 = vperm.xlu0 %318, %v212
      %v320 = vpop.permute.xlu0 %319
      %v322 = vlaneseq
      %v323 = vshrl.u32 %v322, 7
      %v324 = vsub.s32 3, %v323
      %v325 = vrot.slane %v210, %v324
      %v326 = vlaneseq
      %v327 = vshrl.u32 %v326, 7
      %v328 = vsub.s32 7, %v327
      %v329 = vrot.slane %v210, %v328
      %v332 = vlaneseq
      %v333 = vshrl.u32 %v332, 7
      %v334 = vsub.s32 3, %v333
      %v335 = vrot.slane %v325, %v334
      %v336 = vlaneseq
      %v337 = vshrl.u32 %v336, 7
      %v338 = vsub.s32 3, %v337
      %v339 = vrot.slane %v329, %v338
      %v340 = vmul.f32 %v316, %v335
      %v341 = vmul.f32 %v316, %v339
      %v342 = vmul.f32 %v320, %v335
      %v343 = vmul.f32 %v320, %v339
      %v344 = vadd.f32 %v310, %v340
      %v345 = vadd.f32 %v311, %v341
      %v346 = vadd.f32 %v312, %v342
      %v347 = vadd.f32 %v313, %v343
      %v348 = vld [vmem:[%s2] sm:$0xff]
      %v349 = vld [vmem:[%s2 + $0x8] sm:$0xff]
      %351 = vset.pattern.permute.xlu0 0
      %352 = vperm.xlu0 %351, %v348
      %v353 = vpop.permute.xlu0 %352
      %356 = vset.pattern.permute.xlu0 0
      %357 = vperm.xlu0 %356, %v349
      %v358 = vpop.permute.xlu0 %357
      %v360 = vadd.f32 %v344, %v353
      %v361 = vadd.f32 %v345, %v353
      %v362 = vadd.f32 %v346, %v358
      %v363 = vadd.f32 %v347, %v358
      %364 = vst [vmem:[%s208] sm:$0xff] %v360
      %365 = vst [vmem:[%s208 + $0x8] sm:$0xff] %v361
      %366 = vst [vmem:[%s208 + $0x10] sm:$0xff] %v362
      %367 = vst [vmem:[%s208 + $0x18] sm:$0xff] %v363
      %s368 = smul.u32 2, %s19
      %p369 = scmp.lt.s32.totalorder %s18, 1
      %s370 = scalar_select %p369, %s18, 1
      %p371 = scmp.lt.s32.totalorder %s368, 1
      %s372 = scalar_select %p371, %s368, 1
      %s373 = smul.addr %s370, 4
      %s374 = sadd.s32 %s372, %s373
      %s375 = smul.addr %s374, 8
      %s376 = scalar_lea.vmem %s3, %s375
      // Predicated region
      $region33: #{feature_net_forward.3} parent=31 // pred_check
        %p377 = pneg %p116
      $region34: #{feature_net_forward.3} parent=31 // pred_check_branch
        %379 = sbr.rel (%p377) target = $region36
      $region35: #{feature_net_forward.3} parent=31 // pred_region
        %s380 = smul.u32 2, %s19
      $region36: #{feature_net_forward.3} parent=31 // pred_fallthru
        _
    $region32: #{feature_net_forward.3} parent=5 // pred_fallthru
      _
    %p381 = scmp.le.s32.totalorder 2, %s9
    // Predicated region
    $region37: #{feature_net_forward.3} parent=5 // pred_check
      %p382 = pneg %p381
    $region38: #{feature_net_forward.3} parent=5 // pred_check_branch
      %384 = sbr.rel (%p382) target = $region40
    $region39: #{feature_net_forward.3} parent=5 // pred_region
      %s385 = ssub.s32 %s9, 2
      // Predicated region
      $region41: #{feature_net_forward.3} parent=39 // pred_check
        %p386 = pneg %p122
      $region42: #{feature_net_forward.3} parent=39 // pred_check_branch
        %388 = sbr.rel (%p386) target = $region44
      $region43: #{feature_net_forward.3} parent=39 // pred_region
        %s389 = smul.u32 2, %s21
        %p390 = scmp.lt.s32.totalorder %s20, 1
        %s391 = scalar_select %p390, %s20, 1
        %p392 = scmp.lt.s32.totalorder %s389, 1
        %s393 = scalar_select %p392, %s389, 1
        %s394 = smul.addr %s391, 4
        %s395 = sadd.s32 %s393, %s394
        %s396 = smul.addr %s395, 8
        %s397 = scalar_lea.vmem %s3, %s396
      $region44: #{feature_net_forward.3} parent=39 // pred_fallthru
        _
    $region40: #{feature_net_forward.3} parent=5 // pred_fallthru
      _
  $region6: #{feature_net_forward.3} parent=0 // loop_footer
    %s13 = sadd.s32 1, %s9
  $region7: #{feature_net_forward.3} parent=0 // loop_footer_branch
    %8 = sbr.rel target = $region3
  $region8: #{feature_net_forward.3} parent=0 // loop_exit
    _

// kernel: feature_net_forward.5
$region0: #{feature_net_forward.5}
  #allocation0 [shape = 'u32[]', space=smem, size = 0x4, offset = 0x4, fixed_abs, tag = 'smem constant byte address 0x4 - core index']
  #allocation1 [shape = 'u32[144,128]{1,0:T(1,128)}', space=vmem, size = 0x12000, scoped, tag = 'internal scratch']
  %s0 = inlined_call_operand.vmem [shape: bf16[2,16], index: 0, kind: input, shape index: {}]
  %s1 = inlined_call_operand.vmem [shape: bf16[16,2048], index: 1, kind: input, shape index: {}]
  %s2 = inlined_call_operand.vmem [shape: f32[2,2048], index: 2, kind: output, shape index: {}]
  %s3 = sld [smem:[#allocation0]]
  $region64: #{feature_net_forward.5} parent=0
    _
  %s5 = ssub.s32 1, %s3
  %s6 = scalar_select 0, %s5, %s3
  $region1: #{feature_net_forward.5} parent=0
    #allocation2 [shape = 'u8[32768]{0}', space=vmem, size = 0x8000, scoped, tag = 'input window, operand 1']
    loop: start=0, step=1, limit=6
    $region2: #{feature_net_forward.5} parent=1 // loop_pre_header
      _
    $region3: #{feature_net_forward.5} parent=1 // loop_header
      %s8 = sphi 0, %s12
      %p9 = scmp.ge.s32.totalorder %s8, 6
      %s16 = sphi 0, %s16
      %s18 = sphi 0, %s16
      %s19 = sphi 0, %s18
      %s33 = sphi 0, %s19
      %s39 = sphi 0, %s41
      %s42 = sphi 0, %s39
      %s43 = sphi 0, %s42
      %s59 = sphi 0, %s43
      %s65 = sphi 0, %s67
      %s68 = sphi 0, %s65
      %s69 = sphi 0, %s68
      %s85 = sphi 0, %s69
    $region4: #{feature_net_forward.5} parent=1 // loop_header_branch
      %11 = sbr.rel (%p9) target = $region8
    $region5: #{feature_net_forward.5} parent=1 // loop_body
      %s13 = ssub.s32 %s8, 1
      %s14 = ssub.s32 %s8, 2
      %s15 = sadd.s32 %s8, 1
      %s17 = sadd.s32 %s16, 1
      %p20 = scmp.eq.s32.totalorder %s8, 3
      %p21 = scmp.ne.s32.totalorder %s16, %s18
      %p22 = scmp.eq.s32.totalorder %s8, 0
      %p23 = por %p21, %p22
      %p24 = scmp.ne.s32.totalorder %s16, %s18
      %p25 = scmp.eq.s32.totalorder %s13, 3
      %p26 = por %p24, %p25
      %p27 = scmp.ne.s32.totalorder %s18, %s19
      %p28 = scmp.eq.s32.totalorder %s13, 0
      %p29 = por %p27, %p28
      %p30 = scmp.ne.s32.totalorder %s18, %s19
      %p31 = scmp.eq.s32.totalorder %s14, 3
      %p32 = por %p30, %p31
      %p34 = scmp.ne.s32.totalorder %s19, %s33
      %p35 = scmp.eq.s32.totalorder %s14, 0
      %p36 = por %p34, %p35
      %s37 = ssub.s32 %s8, %s15
      %p38 = scmp.eq.s32.totalorder %s37, 0
      %s40 = sadd.s32 %s39, 1
      %s41 = scalar_select %p38, %s39, %s40
      %p44 = pneg %p38
      %p45 = scmp.eq.s32.totalorder %s8, 3
      %p46 = por %p44, %p45
      %p47 = scmp.ne.s32.totalorder %s39, %s42
      %p48 = scmp.eq.s32.totalorder %s8, 0
      %p49 = por %p47, %p48
      %p50 = scmp.ne.s32.totalorder %s39, %s42
      %p51 = scmp.eq.s32.totalorder %s13, 3
      %p52 = por %p50, %p51
      %p53 = scmp.ne.s32.totalorder %s42, %s43
      %p54 = scmp.eq.s32.totalorder %s13, 0
      %p55 = por %p53, %p54
      %p56 = scmp.ne.s32.totalorder %s42, %s43
      %p57 = scmp.eq.s32.totalorder %s14, 3
      %p58 = por %p56, %p57
      %p60 = scmp.ne.s32.totalorder %s43, %s59
      %p61 = scmp.eq.s32.totalorder %s14, 0
      %p62 = por %p60, %p61
      %s63 = ssub.s32 %s8, %s15
      %p64 = scmp.eq.s32.totalorder %s63, 0
      %s66 = sadd.s32 %s65, 1
      %s67 = scalar_select %p64, %s65, %s66
      %p70 = pneg %p64
      %p71 = scmp.eq.s32.totalorder %s8, 3
      %p72 = por %p70, %p71
      %p73 = scmp.ne.s32.totalorder %s65, %s68
      %p74 = scmp.eq.s32.totalorder %s8, 0
      %p75 = por %p73, %p74
      %p76 = scmp.ne.s32.totalorder %s65, %s68
      %p77 = scmp.eq.s32.totalorder %s13, 3
      %p78 = por %p76, %p77
      %p79 = scmp.ne.s32.totalorder %s68, %s69
      %p80 = scmp.eq.s32.totalorder %s13, 0
      %p81 = por %p79, %p80
      %p82 = scmp.ne.s32.totalorder %s68, %s69
      %p83 = scmp.eq.s32.totalorder %s14, 3
      %p84 = por %p82, %p83
      %p86 = scmp.ne.s32.totalorder %s69, %s85
      %p87 = scmp.eq.s32.totalorder %s14, 0
      %p88 = por %p86, %p87
      %p89 = scmp.le.s32.totalorder 1, %s8
      %p90 = scmp.lt.s32.totalorder %s8, 5
      %p91 = pnand %p89, %p90
      %p92 = pneg %p91
      // Predicated region
      $region9: #{feature_net_forward.5} parent=5 // pred_check
        _
      $region10: #{feature_net_forward.5} parent=5 // pred_check_branch
        %94 = sbr.rel (%p91) target = $region12
      $region11: #{feature_net_forward.5} parent=5 // pred_region
        %s95 = ssub.s32 %s8, 1
        // Predicated region
        $region13: #{feature_net_forward.5} parent=11 // pred_check
          %p96 = pneg %p29
        $region14: #{feature_net_forward.5} parent=11 // pred_check_branch
          %98 = sbr.rel (%p96) target = $region16
        $region15: #{feature_net_forward.5} parent=11 // pred_region
          _
        $region16: #{feature_net_forward.5} parent=11 // pred_fallthru
          _
      $region12: #{feature_net_forward.5} parent=5 // pred_fallthru
        _
      %p99 = scmp.lt.s32.totalorder %s8, 4
      // Predicated region
      $region17: #{feature_net_forward.5} parent=5 // pred_check
        %p100 = pneg %p99
      $region18: #{feature_net_forward.5} parent=5 // pred_check_branch
        %102 = sbr.rel (%p100) target = $region20
      $region19: #{feature_net_forward.5} parent=5 // pred_region
        // Predicated region
        $region21: #{feature_net_forward.5} parent=19 // pred_check
          %p103 = pneg %p49
        $region22: #{feature_net_forward.5} parent=19 // pred_check_branch
          %105 = sbr.rel (%p103) target = $region24
        $region23: #{feature_net_forward.5} parent=19 // pred_region
          %s106 = sand.u32 %s39, 1
          %s107 = sand.u32 %s39, 1
          %s108 = smul.addr %s107, 32
          %s109 = scalar_lea.vmem [#allocation2], %s108
          %s110 = smul.u32 4, %s8
          %s111 = smul.addr %s110, 4
          %s112 = scalar_lea.vmem %s1, %s111
          // Predicated region
          $region25: #{feature_net_forward.5} parent=23 // pred_check
            _
          $region26: #{feature_net_forward.5} parent=23 // pred_check_branch
            %114 = sbr.rel (0) target = $region28
          $region27: #{feature_net_forward.5} parent=23 // pred_region
            // Predicated region
            $region29: #{feature_net_forward.5} parent=27 // pred_check
              _
            $region30: #{feature_net_forward.5} parent=27 // pred_check_branch
              %116 = sbr.rel (0) target = $region32
            $region31: #{feature_net_forward.5} parent=27 // pred_region
              loop: start=0, step=1, limit=1
              $region33: #{feature_net_forward.5} parent=31 // loop_pre_header
                _
              $region34: #{feature_net_forward.5} parent=31 // loop_header
                %s118 = sphi 0, %s122
                %p119 = scmp.ge.s32.totalorder %s118, 1
                %s123 = sphi %s112, %s112
                %s124 = sphi %s109, %s109
              $region35: #{feature_net_forward.5} parent=31 // loop_header_branch
                %121 = sbr.rel (%p119) target = $region39
              $region36: #{feature_net_forward.5} parent=31 // loop_body
                %v125 = vld [vmem:[%s123] sm:$0xff]
                %126 = vst [vmem:[%s124] sm:$0xff] %v125
                %v127 = vld [vmem:[%s123 + $0x8] sm:$0xff]
                %128 = vst [vmem:[%s124 + $0x8] sm:$0xff] %v127
                %v129 = vld [vmem:[%s123 + $0x40] sm:$0xff]
                %130 = vst [vmem:[%s124 + $0x10] sm:$0xff] %v129
                %v131 = vld [vmem:[%s123 + $0x48] sm:$0xff]
                %132 = vst [vmem:[%s124 + $0x18] sm:$0xff] %v131
              $region37: #{feature_net_forward.5} parent=31 // loop_footer
                %s122 = sadd.s32 1, %s118
              $region38: #{feature_net_forward.5} parent=31 // loop_footer_branch
                %117 = sbr.rel target = $region34
              $region39: #{feature_net_forward.5} parent=31 // loop_exit
                _
            $region32: #{feature_net_forward.5} parent=27 // pred_fallthru
              _
            // Predicated region
            $region40: #{feature_net_forward.5} parent=27 // pred_check
              _
            $region41: #{feature_net_forward.5} parent=27 // pred_check_branch
              %134 = sbr.rel target = $region43
            $region42: #{feature_net_forward.5} parent=27 // pred_region
              _
            $region43: #{feature_net_forward.5} parent=27 // pred_fallthru
              _
          $region28: #{feature_net_forward.5} parent=23 // pred_fallthru
            _
          %135 = vnop
        $region24: #{feature_net_forward.5} parent=19 // pred_fallthru
          _
      $region20: #{feature_net_forward.5} parent=5 // pred_fallthru
        _
      %p136 = scmp.le.s32.totalorder 1, %s8
      %p137 = scmp.lt.s32.totalorder %s8, 5
      %p138 = pnand %p136, %p137
      %p139 = pneg %p138
      // Predicated region
      $region44: #{feature_net_forward.5} parent=5 // pred_check
        _
      $region45: #{feature_net_forward.5} parent=5 // pred_check_branch
        %141 = sbr.rel (%p138) target = $region47
      $region46: #{feature_net_forward.5} parent=5 // pred_region
        %s142 = ssub.s32 %s8, 1
        %s143 = sand.u32 %s42, 1
        %s144 = sand.u32 %s42, 1
        %s145 = smul.addr %s144, 32
        %s146 = scalar_lea.vmem [#allocation2], %s145
        // Predicated region
        $region48: #{feature_net_forward.5} parent=46 // pred_check
          %p147 = pneg %p55
        $region49: #{feature_net_forward.5} parent=46 // pred_check_branch
          %149 = sbr.rel (%p147) target = $region51
        $region50: #{feature_net_forward.5} parent=46 // pred_region
          _
        $region51: #{feature_net_forward.5} parent=46 // pred_fallthru
          _
        %p150 = pneg %p29
        %p151 = pneg %p26
        %s152 = sand.u32 %s42, 1
        %s153 = sand.u32 %s42, 1
        %s154 = smul.addr %s153, 32
        %s155 = scalar_lea.vmem [#allocation2], %s154
        %p156 = pneg %p55
        %p157 = pneg %p52
        %p158 = pneg %p81
        %p159 = pneg %p78
        %s160 = smul.u32 4, %s13
        %p161 = scmp.lt.s32.totalorder %s160, 15
        %s162 = scalar_select %p161, %s160, 15
        %s163 = smul.addr %s162, 2
        %s164 = scalar_lea.vmem %s2, %s163
        %s165 = smul.u32 4, %s13
        %s166 = smul.u32 4, %s13
        %p167 = scmp.lt.s32.totalorder %s166, 15
        %s168 = scalar_select %p167, %s166, 15
        %s169 = smul.addr %s168, 2
        %s170 = scalar_lea.vmem %s2, %s169
        %s171 = smul.u32 4, %s13
        %v173 = vld [vmem:[%s0] sm:$0x1]
        %v174 = vld [vmem:[%s146] sm:$0xff]
        %v175 = vld [vmem:[%s146 + $0x8] sm:$0xff]
        %v176 = vld [vmem:[%s146 + $0x10] sm:$0xff]
        %v177 = vld [vmem:[%s146 + $0x18] sm:$0xff]
        %v182 = vunpack.c.l.b16 %v174
        %v183 = vunpack.c.h.b16 %v174
        %v184 = vunpack.c.l.b16 %v175
        %v185 = vunpack.c.h.b16 %v175
        %v186 = vunpack.c.l.b16 %v176
        %v187 = vunpack.c.h.b16 %v176
        %v188 = vunpack.c.l.b16 %v177
        %v189 = vunpack.c.h.b16 %v177
        %v190 = vpack.c.b16 %v186, %v182
        %v191 = vpack.c.b16 %v187, %v183
        %v192 = vpack.c.b16 %v188, %v184
        %v193 = vpack.c.b16 %v189, %v185
        %vm198 = vcmask 130048
        %v200 = vsel %vm198, %v173, 0
        %202 = vmatprep.subr.bf16.mxu0 %v191
        %203 = vmatpush1.bf16.msra.mxu0 %v190
        %204 = vmatprep.subr.bf16.mxu0 0
        %205 = vmatpush1.bf16.msra.mxu0 0
        %206 = vmatprep.subr.bf16.mxu0 0
        %207 = vmatpush1.bf16.msra.mxu0 0
        %208 = vmatprep.subr.bf16.mxu0 0
        %209 = vmatpush1.bf16.msra.mxu0 0
        %210 = vmatprep.subr.bf16.mxu0 0
        %211 = vmatpush1.bf16.msra.mxu0 0
        %212 = vmatprep.subr.bf16.mxu0 0
        %213 = vmatpush1.bf16.msra.mxu0 0
        %214 = vmatprep.subr.bf16.mxu0 0
        %215 = vmatpush1.bf16.msra.mxu0 0
        %216 = vmatprep.subr.bf16.mxu0 0
        %217 = vmatpush1.bf16.msra.mxu0 0
        %218 = vmatprep.subr.bf16.mxu0 0
        %219 = vmatpush1.bf16.msra.mxu0 0
        %220 = vmatprep.subr.bf16.mxu0 0
        %221 = vmatpush1.bf16.msra.mxu0 0
        %222 = vmatprep.subr.bf16.mxu0 0
        %223 = vmatpush1.bf16.msra.mxu0 0
        %224 = vmatprep.subr.bf16.mxu0 0
        %225 = vmatpush1.bf16.msra.mxu0 0
        %226 = vmatprep.subr.bf16.mxu0 0
        %227 = vmatpush1.bf16.msra.mxu0 0
        %228 = vmatprep.subr.bf16.mxu0 0
        %229 = vmatpush1.bf16.msra.mxu0 0
        %230 = vmatprep.subr.bf16.mxu0 0
        %231 = vmatpush1.bf16.msra.mxu0 0
        %232 = vmatprep.subr.bf16.mxu0 0
        %233 = vmatpush1.bf16.msra.mxu0 0
        %234 = vmatprep.mubr.bf16.mxu0 0
        %235 = vmatmul.mubr.bf16.gmra.mrb[0].mxu0 %v200
        %v236 = vpop.f32.mrb[0].mxu0
        %v237 = vadd.f32 0.0, %v236
        %v238 = vpop.f32.mrb[0].mxu0
        %v239 = vadd.f32 0.0, %v238
        %v240 = vpop.f32.mrb[0].mxu0
        %v241 = vpop.f32.mrb[0].mxu0
        %242 = vdwg.mxu0
        %243 = vmatprep.subr.bf16.mxu0 %v193
        %244 = vmatpush1.bf16.msra.mxu0 %v192
        %245 = vmatprep.subr.bf16.mxu0 0
        %246 = vmatpush1.bf16.msra.mxu0 0
        %247 = vmatprep.subr.bf16.mxu0 0
        %248 = vmatpush1.bf16.msra.mxu0 0
        %249 = vmatprep.subr.bf16.mxu0 0
        %250 = vmatpush1.bf16.msra.mxu0 0
        %251 = vmatprep.subr.bf16.mxu0 0
        %252 = vmatpush1.bf16.msra.mxu0 0
        %253 = vmatprep.subr.bf16.mxu0 0
        %254 = vmatpush1.bf16.msra.mxu0 0
        %255 = vmatprep.subr.bf16.mxu0 0
        %256 = vmatpush1.bf16.msra.mxu0 0
        %257 = vmatprep.subr.bf16.mxu0 0
        %258 = vmatpush1.bf16.msra.mxu0 0
        %259 = vmatprep.subr.bf16.mxu0 0
        %260 = vmatpush1.bf16.msra.mxu0 0
        %261 = vmatprep.subr.bf16.mxu0 0
        %262 = vmatpush1.bf16.msra.mxu0 0
        %263 = vmatprep.subr.bf16.mxu0 0
        %264 = vmatpush1.bf16.msra.mxu0 0
        %265 = vmatprep.subr.bf16.mxu0 0
        %266 = vmatpush1.bf16.msra.mxu0 0
        %267 = vmatprep.subr.bf16.mxu0 0
        %268 = vmatpush1.bf16.msra.mxu0 0
        %269 = vmatprep.subr.bf16.mxu0 0
        %270 = vmatpush1.bf16.msra.mxu0 0
        %271 = vmatprep.subr.bf16.mxu0 0
        %272 = vmatpush1.bf16.msra.mxu0 0
        %273 = vmatprep.subr.bf16.mxu0 0
        %274 = vmatpush1.bf16.msra.mxu0 0
        %275 = vmatprep.mubr.bf16.mxu0 0
        %276 = vmatmul.mubr.bf16.gmra.mrb[0].mxu0 %v200
        %v277 = vpop.f32.mrb[0].mxu0
        %v278 = vadd.f32 0.0, %v277
        %v279 = vpop.f32.mrb[0].mxu0
        %v280 = vadd.f32 0.0, %v279
        %v281 = vpop.f32.mrb[0].mxu0
        %v282 = vpop.f32.mrb[0].mxu0
        %283 = vdwg.mxu0
        %v288 = vcombine.low %v237, %v239
        %v289 = vcombine.low %v278, %v280
        %v291 = vunpack.c.l.s4 1983009808
        %v292 = vunpack.c.0.s8 %v291
        %v293 = vlaneseq
        %v294 = vshrl.u32 %v293, 7
        %v295 = vsub.s32 %v292, %v294
        %v296 = vrot.slane %v288, %v295
        %v298 = vunpack.c.l.s4 1983009808
        %v299 = vunpack.c.0.s8 %v298
        %v300 = vlaneseq
        %v301 = vshrl.u32 %v300, 7
        %v302 = vsub.s32 %v299, %v301
        %v303 = vrot.slane %v289, %v302
        %v304 = vcombine.low %v296, %v303
        %306 = vst [vmem:[%s170] sm:$0xff] %v304
        %s307 = smul.u32 4, %s13
        %p308 = scmp.lt.s32.totalorder %s307, 15
        %s309 = scalar_select %p308, %s307, 15
        %s310 = smul.addr %s309, 2
        %s311 = scalar_lea.vmem %s2, %s310
        // Predicated region
        $region52: #{feature_net_forward.5} parent=46 // pred_check
          %p312 = pneg %p78
        $region53: #{feature_net_forward.5} parent=46 // pred_check_branch
          %314 = sbr.rel (%p312) target = $region55
        $region54: #{feature_net_forward.5} parent=46 // pred_region
          %s315 = smul.u32 4, %s13
        $region55: #{feature_net_forward.5} parent=46 // pred_fallthru
          _
      $region47: #{feature_net_forward.5} parent=5 // pred_fallthru
        _
      %p316 = scmp.le.s32.totalorder 2, %s8
      // Predicated region
      $region56: #{feature_net_forward.5} parent=5 // pred_check
        %p317 = pneg %p316
      $region57: #{feature_net_forward.5} parent=5 // pred_check_branch
        %319 = sbr.rel (%p317) target = $region59
      $region58: #{feature_net_forward.5} parent=5 // pred_region
        %s320 = ssub.s32 %s8, 2
        // Predicated region
        $region60: #{feature_net_forward.5} parent=58 // pred_check
          %p321 = pneg %p84
        $region61: #{feature_net_forward.5} parent=58 // pred_check_branch
          %323 = sbr.rel (%p321) target = $region63
        $region62: #{feature_net_forward.5} parent=58 // pred_region
          %s324 = smul.u32 4, %s14
          %p325 = scmp.lt.s32.totalorder %s324, 15
          %s326 = scalar_select %p325, %s324, 15
          %s327 = smul.addr %s326, 2
          %s328 = scalar_lea.vmem %s2, %s327
        $region63: #{feature_net_forward.5} parent=58 // pred_fallthru
          _
      $region59: #{feature_net_forward.5} parent=5 // pred_fallthru
        _
    $region6: #{feature_net_forward.5} parent=1 // loop_footer
      %s12 = sadd.s32 1, %s8
    $region7: #{feature_net_forward.5} parent=1 // loop_footer_branch
      %7 = sbr.rel target = $region3
    $region8: #{feature_net_forward.5} parent=1 // loop_exit
      _

// kernel: feature_net_forward.4
$region0: #{feature_net_forward.4}
  #allocation0 [shape = 'u32[]', space=smem, size = 0x4, offset = 0x4, fixed_abs, tag = 'smem constant byte address 0x4 - core index']
  #allocation1 [shape = 'u32[144,128]{1,0:T(1,128)}', space=vmem, size = 0x12000, scoped, tag = 'internal scratch']
  %s0 = inlined_call_operand.vmem [shape: bf16[16,4,8,256], index: 0, kind: input, shape index: {}]
  %s1 = inlined_call_operand.vmem [shape: f32[16,4,256], index: 1, kind: input, shape index: {}]
  %s2 = inlined_call_operand.vmem [shape: bf16[16,8,256], index: 2, kind: output, shape index: {0}]
  %s3 = inlined_call_operand.vmem [shape: f32[16,8], index: 3, kind: output, shape index: {1}]
  %4 = xla_tuple %s2, %s3
  %s5 = sld [smem:[#allocation0]]
  $region49: #{feature_net_forward.4} parent=0
    _
  %s7 = ssub.s32 1, %s5
  %s8 = scalar_select 0, %s7, %s5
  loop: start=0, step=1, limit=4
  $region2: #{feature_net_forward.4} parent=0 // loop_pre_header
    _
  $region3: #{feature_net_forward.4} parent=0 // loop_header
    %s10 = sphi 0, %s14
    %p11 = scmp.ge.s32.totalorder %s10, 4
    %s20 = sphi 0, %s22
    %s23 = sphi 0, %s20
    %s24 = sphi 0, %s23
    %s40 = sphi 0, %s24
    %s46 = sphi 0, %s48
    %s49 = sphi 0, %s46
    %s50 = sphi 0, %s49
    %s66 = sphi 0, %s50
    %s72 = sphi 0, %s74
    %s75 = sphi 0, %s72
    %s76 = sphi 0, %s75
    %s92 = sphi 0, %s76
    %s98 = sphi 0, %s100
    %s101 = sphi 0, %s98
    %s102 = sphi 0, %s101
    %s118 = sphi 0, %s102
  $region4: #{feature_net_forward.4} parent=0 // loop_header_branch
    %13 = sbr.rel (%p11) target = $region8
  $region5: #{feature_net_forward.4} parent=0 // loop_body
    %s15 = ssub.s32 %s10, 1
    %s16 = ssub.s32 %s10, 2
    %s17 = sadd.s32 %s10, 1
    %s18 = ssub.s32 %s10, %s17
    %p19 = scmp.eq.s32.totalorder %s18, 0
    %s21 = sadd.s32 %s20, 1
    %s22 = scalar_select %p19, %s20, %s21
    %p25 = pneg %p19
    %p26 = scmp.eq.s32.totalorder %s10, 1
    %p27 = por %p25, %p26
    %p28 = scmp.ne.s32.totalorder %s20, %s23
    %p29 = scmp.eq.s32.totalorder %s10, 0
    %p30 = por %p28, %p29
    %p31 = scmp.ne.s32.totalorder %s20, %s23
    %p32 = scmp.eq.s32.totalorder %s15, 1
    %p33 = por %p31, %p32
    %p34 = scmp.ne.s32.totalorder %s23, %s24
    %p35 = scmp.eq.s32.totalorder %s15, 0
    %p36 = por %p34, %p35
    %p37 = scmp.ne.s32.totalorder %s23, %s24
    %p38 = scmp.eq.s32.totalorder %s16, 1
    %p39 = por %p37, %p38
    %p41 = scmp.ne.s32.totalorder %s24, %s40
    %p42 = scmp.eq.s32.totalorder %s16, 0
    %p43 = por %p41, %p42
    %s44 = ssub.s32 %s10, %s17
    %p45 = scmp.eq.s32.totalorder %s44, 0
    %s47 = sadd.s32 %s46, 1
    %s48 = scalar_select %p45, %s46, %s47
    %p51 = pneg %p45
    %p52 = scmp.eq.s32.totalorder %s10, 1
    %p53 = por %p51, %p52
    %p54 = scmp.ne.s32.totalorder %s46, %s49
    %p55 = scmp.eq.s32.totalorder %s10, 0
    %p56 = por %p54, %p55
    %p57 = scmp.ne.s32.totalorder %s46, %s49
    %p58 = scmp.eq.s32.totalorder %s15, 1
    %p59 = por %p57, %p58
    %p60 = scmp.ne.s32.totalorder %s49, %s50
    %p61 = scmp.eq.s32.totalorder %s15, 0
    %p62 = por %p60, %p61
    %p63 = scmp.ne.s32.totalorder %s49, %s50
    %p64 = scmp.eq.s32.totalorder %s16, 1
    %p65 = por %p63, %p64
    %p67 = scmp.ne.s32.totalorder %s50, %s66
    %p68 = scmp.eq.s32.totalorder %s16, 0
    %p69 = por %p67, %p68
    %s70 = ssub.s32 %s10, %s17
    %p71 = scmp.eq.s32.totalorder %s70, 0
    %s73 = sadd.s32 %s72, 1
    %s74 = scalar_select %p71, %s72, %s73
    %p77 = pneg %p71
    %p78 = scmp.eq.s32.totalorder %s10, 1
    %p79 = por %p77, %p78
    %p80 = scmp.ne.s32.totalorder %s72, %s75
    %p81 = scmp.eq.s32.totalorder %s10, 0
    %p82 = por %p80, %p81
    %p83 = scmp.ne.s32.totalorder %s72, %s75
    %p84 = scmp.eq.s32.totalorder %s15, 1
    %p85 = por %p83, %p84
    %p86 = scmp.ne.s32.totalorder %s75, %s76
    %p87 = scmp.eq.s32.totalorder %s15, 0
    %p88 = por %p86, %p87
    %p89 = scmp.ne.s32.totalorder %s75, %s76
    %p90 = scmp.eq.s32.totalorder %s16, 1
    %p91 = por %p89, %p90
    %p93 = scmp.ne.s32.totalorder %s76, %s92
    %p94 = scmp.eq.s32.totalorder %s16, 0
    %p95 = por %p93, %p94
    %s96 = ssub.s32 %s10, %s17
    %p97 = scmp.eq.s32.totalorder %s96, 0
    %s99 = sadd.s32 %s98, 1
    %s100 = scalar_select %p97, %s98, %s99
    %p103 = pneg %p97
    %p104 = scmp.eq.s32.totalorder %s10, 1
    %p105 = por %p103, %p104
    %p106 = scmp.ne.s32.totalorder %s98, %s101
    %p107 = scmp.eq.s32.totalorder %s10, 0
    %p108 = por %p106, %p107
    %p109 = scmp.ne.s32.totalorder %s98, %s101
    %p110 = scmp.eq.s32.totalorder %s15, 1
    %p111 = por %p109, %p110
    %p112 = scmp.ne.s32.totalorder %s101, %s102
    %p113 = scmp.eq.s32.totalorder %s15, 0
    %p114 = por %p112, %p113
    %p115 = scmp.ne.s32.totalorder %s101, %s102
    %p116 = scmp.eq.s32.totalorder %s16, 1
    %p117 = por %p115, %p116
    %p119 = scmp.ne.s32.totalorder %s102, %s118
    %p120 = scmp.eq.s32.totalorder %s16, 0
    %p121 = por %p119, %p120
    %p122 = scmp.le.s32.totalorder 1, %s10
    %p123 = scmp.lt.s32.totalorder %s10, 3
    %p124 = pnand %p122, %p123
    %p125 = pneg %p124
    // Predicated region
    $region9: #{feature_net_forward.4} parent=5 // pred_check
      _
    $region10: #{feature_net_forward.4} parent=5 // pred_check_branch
      %127 = sbr.rel (%p124) target = $region12
    $region11: #{feature_net_forward.4} parent=5 // pred_region
      %s128 = ssub.s32 %s10, 1
    $region12: #{feature_net_forward.4} parent=5 // pred_fallthru
      _
    %p129 = scmp.lt.s32.totalorder %s10, 2
    // Predicated region
    $region13: #{feature_net_forward.4} parent=5 // pred_check
      %p130 = pneg %p129
    $region14: #{feature_net_forward.4} parent=5 // pred_check_branch
      %132 = sbr.rel (%p130) target = $region16
    $region15: #{feature_net_forward.4} parent=5 // pred_region
      // Predicated region
      $region17: #{feature_net_forward.4} parent=15 // pred_check
        %p133 = pneg %p30
      $region18: #{feature_net_forward.4} parent=15 // pred_check_branch
        %135 = sbr.rel (%p133) target = $region20
      $region19: #{feature_net_forward.4} parent=15 // pred_region
        %s136 = smul.u32 8, %s10
        %p137 = scmp.lt.s32.totalorder %s136, 15
        %s138 = scalar_select %p137, %s136, 15
        %s139 = smul.addr %s138, 8
        %s140 = smul.addr %s139, 4
        %s141 = scalar_lea.vmem %s0, %s140
        %s142 = smul.u32 8, %s10
      $region20: #{feature_net_forward.4} parent=15 // pred_fallthru
        _
      // Predicated region
      $region21: #{feature_net_forward.4} parent=15 // pred_check
        %p143 = pneg %p56
      $region22: #{feature_net_forward.4} parent=15 // pred_check_branch
        %145 = sbr.rel (%p143) target = $region24
      $region23: #{feature_net_forward.4} parent=15 // pred_region
        %s146 = smul.u32 8, %s10
        %p147 = scmp.lt.s32.totalorder %s146, 15
        %s148 = scalar_select %p147, %s146, 15
        %s149 = smul.addr %s148, 2
        %s150 = smul.addr %s149, 4
        %s151 = scalar_lea.vmem %s1, %s150
        %s152 = smul.u32 8, %s10
      $region24: #{feature_net_forward.4} parent=15 // pred_fallthru
        _
    $region16: #{feature_net_forward.4} parent=5 // pred_fallthru
      _
    %p153 = scmp.le.s32.totalorder 1, %s10
    %p154 = scmp.lt.s32.totalorder %s10, 3
    %p155 = pnand %p153, %p154
    %p156 = pneg %p155
    // Predicated region
    $region25: #{feature_net_forward.4} parent=5 // pred_check
      _
    $region26: #{feature_net_forward.4} parent=5 // pred_check_branch
      %158 = sbr.rel (%p155) target = $region28
    $region27: #{feature_net_forward.4} parent=5 // pred_region
      %s159 = ssub.s32 %s10, 1
      %s160 = smul.u32 8, %s15
      %p161 = scmp.lt.s32.totalorder %s160, 15
      %s162 = scalar_select %p161, %s160, 15
      %s163 = smul.addr %s162, 8
      %s164 = smul.addr %s163, 4
      %s165 = scalar_lea.vmem %s0, %s164
      %p166 = pneg %p36
      %p167 = pneg %p33
      %s168 = smul.u32 8, %s15
      %p169 = scmp.lt.s32.totalorder %s168, 15
      %s170 = scalar_select %p169, %s168, 15
      %s171 = smul.addr %s170, 2
      %s172 = smul.addr %s171, 4
      %s173 = scalar_lea.vmem %s1, %s172
      %p174 = pneg %p62
      %p175 = pneg %p59
      %p176 = pneg %p88
      %p177 = pneg %p85
      %s178 = smul.u32 8, %s15
      %p179 = scmp.lt.s32.totalorder %s178, 15
      %s180 = scalar_select %p179, %s178, 15
      %s181 = smul.addr %s180, 2
      %s182 = smul.addr %s181, 4
      %s183 = scalar_lea.vmem %s2, %s182
      %p184 = pneg %p114
      %p185 = pneg %p111
      %p186 = scmp.lt.s32.totalorder %s15, 1
      %s187 = scalar_select %p186, %s15, 1
      %s188 = smul.addr %s187, 8
      %s189 = scalar_lea.vmem %s3, %s188
      %s190 = smul.u32 8, %s15
      %p191 = scmp.lt.s32.totalorder %s190, 15
      %s192 = scalar_select %p191, %s190, 15
      %s193 = smul.addr %s192, 8
      %s194 = smul.addr %s193, 4
      %s195 = scalar_lea.vmem %s0, %s194
      %s196 = smul.u32 8, %s15
      %s197 = smul.u32 8, %s15
      %p198 = scmp.lt.s32.totalorder %s197, 15
      %s199 = scalar_select %p198, %s197, 15
      %s200 = smul.addr %s199, 2
      %s201 = smul.addr %s200, 4
      %s202 = scalar_lea.vmem %s1, %s201
      %s203 = smul.u32 8, %s15
      %s204 = smul.u32 8, %s15
      %p205 = scmp.lt.s32.totalorder %s204, 15
      %s206 = scalar_select %p205, %s204, 15
      %s207 = smul.addr %s206, 2
      %s208 = smul.addr %s207, 4
      %s209 = scalar_lea.vmem %s2, %s208
      %s210 = smul.u32 8, %s15
      %p211 = scmp.lt.s32.totalorder %s15, 1
      %s212 = scalar_select %p211, %s15, 1
      %s213 = smul.addr %s212, 8
      %s214 = scalar_lea.vmem %s3, %s213
      %v215 = vld [vmem:[%s195] sm:$0xff]
      %v216 = vld [vmem:[%s195 + $0x8] sm:$0xff]
      %v217 = vld [vmem:[%s195 + $0x10] sm:$0xff]
      %v218 = vld [vmem:[%s195 + $0x18] sm:$0xff]
      %v219 = vld [vmem:[%s195 + $0x20] sm:$0xff]
      %v220 = vld [vmem:[%s195 + $0x28] sm:$0xff]
      %v221 = vld [vmem:[%s195 + $0x30] sm:$0xff]
      %v222 = vld [vmem:[%s195 + $0x38] sm:$0xff]
      %v223 = vld [vmem:[%s195 + $0x40] sm:$0xff]
      %v224 = vld [vmem:[%s195 + $0x48] sm:$0xff]
      %v225 = vld [vmem:[%s195 + $0x50] sm:$0xff]
      %v226 = vld [vmem:[%s195 + $0x58] sm:$0xff]
      %v227 = vld [vmem:[%s195 + $0x60] sm:$0xff]
      %v228 = vld [vmem:[%s195 + $0x68] sm:$0xff]
      %v229 = vld [vmem:[%s195 + $0x70] sm:$0xff]
      %v230 = vld [vmem:[%s195 + $0x78] sm:$0xff]
      %v231 = vld [vmem:[%s195 + $0x80] sm:$0xff]
      %v232 = vld [vmem:[%s195 + $0x88] sm:$0xff]
      %v233 = vld [vmem:[%s195 + $0x90] sm:$0xff]
      %v234 = vld [vmem:[%s195 + $0x98] sm:$0xff]
      %v235 = vld [vmem:[%s195 + $0xa0] sm:$0xff]
      %v236 = vld [vmem:[%s195 + $0xa8] sm:$0xff]
      %v237 = vld [vmem:[%s195 + $0xb0] sm:$0xff]
      %v238 = vld [vmem:[%s195 + $0xb8] sm:$0xff]
      %v239 = vld [vmem:[%s195 + $0xc0] sm:$0xff]
      %v240 = vld [vmem:[%s195 + $0xc8] sm:$0xff]
      %v241 = vld [vmem:[%s195 + $0xd0] sm:$0xff]
      %v242 = vld [vmem:[%s195 + $0xd8] sm:$0xff]
      %v243 = vld [vmem:[%s195 + $0xe0] sm:$0xff]
      %v244 = vld [vmem:[%s195 + $0xe8] sm:$0xff]
      %v245 = vld [vmem:[%s195 + $0xf0] sm:$0xff]
      %v246 = vld [vmem:[%s195 + $0xf8] sm:$0xff]
      %v247 = vunpack.c.l.bf16 %v215
      %v248 = vunpack.c.h.bf16 %v215
      %v249 = vunpack.c.l.bf16 %v216
      %v250 = vunpack.c.h.bf16 %v216
      %v251 = vunpack.c.l.bf16 %v217
      %v252 = vunpack.c.h.bf16 %v217
      %v253 = vunpack.c.l.bf16 %v218
      %v254 = vunpack.c.h.bf16 %v218
      %v255 = vunpack.c.l.bf16 %v219
      %v256 = vunpack.c.h.bf16 %v219
      %v257 = vunpack.c.l.bf16 %v220
      %v258 = vunpack.c.h.bf16 %v220
      %v259 = vunpack.c.l.bf16 %v221
      %v260 = vunpack.c.h.bf16 %v221
      %v261 = vunpack.c.l.bf16 %v222
      %v262 = vunpack.c.h.bf16 %v222
      %v263 = vunpack.c.l.bf16 %v223
      %v264 = vunpack.c.h.bf16 %v223
      %v265 = vunpack.c.l.bf16 %v224
      %v266 = vunpack.c.h.bf16 %v224
      %v267 = vunpack.c.l.bf16 %v225
      %v268 = vunpack.c.h.bf16 %v225
      %v269 = vunpack.c.l.bf16 %v226
      %v270 = vunpack.c.h.bf16 %v226
      %v271 = vunpack.c.l.bf16 %v227
      %v272 = vunpack.c.h.bf16 %v227
      %v273 = vunpack.c.l.bf16 %v228
      %v274 = vunpack.c.h.bf16 %v228
      %v275 = vunpack.c.l.bf16 %v229
      %v276 = vunpack.c.h.bf16 %v229
      %v277 = vunpack.c.l.bf16 %v230
      %v278 = vunpack.c.h.bf16 %v230
      %v279 = vunpack.c.l.bf16 %v231
      %v280 = vunpack.c.h.bf16 %v231
      %v281 = vunpack.c.l.bf16 %v232
      %v282 = vunpack.c.h.bf16 %v232
      %v283 = vunpack.c.l.bf16 %v233
      %v284 = vunpack.c.h.bf16 %v233
      %v285 = vunpack.c.l.bf16 %v234
      %v286 = vunpack.c.h.bf16 %v234
      %v287 = vunpack.c.l.bf16 %v235
      %v288 = vunpack.c.h.bf16 %v235
      %v289 = vunpack.c.l.bf16 %v236
      %v290 = vunpack.c.h.bf16 %v236
      %v291 = vunpack.c.l.bf16 %v237
      %v292 = vunpack.c.h.bf16 %v237
      %v293 = vunpack.c.l.bf16 %v238
      %v294 = vunpack.c.h.bf16 %v238
      %v295 = vunpack.c.l.bf16 %v239
      %v296 = vunpack.c.h.bf16 %v239
      %v297 = vunpack.c.l.bf16 %v240
      %v298 = vunpack.c.h.bf16 %v240
      %v299 = vunpack.c.l.bf16 %v241
      %v300 = vunpack.c.h.bf16 %v241
      %v301 = vunpack.c.l.bf16 %v242
      %v302 = vunpack.c.h.bf16 %v242
      %v303 = vunpack.c.l.bf16 %v243
      %v304 = vunpack.c.h.bf16 %v243
      %v305 = vunpack.c.l.bf16 %v244
      %v306 = vunpack.c.h.bf16 %v244
      %v307 = vunpack.c.l.bf16 %v245
      %v308 = vunpack.c.h.bf16 %v245
      %v309 = vunpack.c.l.bf16 %v246
      %v310 = vunpack.c.h.bf16 %v246
      %v311 = vld [vmem:[%s202] sm:$0xff]
      %v312 = vld [vmem:[%s202 + $0x8] sm:$0xff]
      %v313 = vld [vmem:[%s202 + $0x10] sm:$0xff]
      %v314 = vld [vmem:[%s202 + $0x18] sm:$0xff]
      %v315 = vld [vmem:[%s202 + $0x20] sm:$0xff]
      %v316 = vld [vmem:[%s202 + $0x28] sm:$0xff]
      %v317 = vld [vmem:[%s202 + $0x30] sm:$0xff]
      %v318 = vld [vmem:[%s202 + $0x38] sm:$0xff]
      %v327 = vlaneseq
      %v328 = vshrl.u32 %v327, 7
      %v329 = vsub.s32 0, %v328
      %v330 = vrot.slane %v311, %v329
      %v331 = vlaneseq
      %v332 = vshrl.u32 %v331, 7
      %v333 = vsub.s32 4, %v332
      %v334 = vrot.slane %v311, %v333
      %v335 = vlaneseq
      %v336 = vshrl.u32 %v335, 7
      %v337 = vsub.s32 0, %v336
      %v338 = vrot.slane %v312, %v337
      %v339 = vlaneseq
      %v340 = vshrl.u32 %v339, 7
      %v341 = vsub.s32 4, %v340
      %v342 = vrot.slane %v312, %v341
      %v343 = vlaneseq
      %v344 = vshrl.u32 %v343, 7
      %v345 = vsub.s32 0, %v344
      %v346 = vrot.slane %v313, %v345
      %v347 = vlaneseq
      %v348 = vshrl.u32 %v347, 7
      %v349 = vsub.s32 4, %v348
      %v350 = vrot.slane %v313, %v349
      %v351 = vlaneseq
      %v352 = vshrl.u32 %v351, 7
      %v353 = vsub.s32 0, %v352
      %v354 = vrot.slane %v314, %v353
      %v355 = vlaneseq
      %v356 = vshrl.u32 %v355, 7
      %v357 = vsub.s32 4, %v356
      %v358 = vrot.slane %v314, %v357
      %v359 = vlaneseq
      %v360 = vshrl.u32 %v359, 7
      %v361 = vsub.s32 0, %v360
      %v362 = vrot.slane %v315, %v361
      %v363 = vlaneseq
      %v364 = vshrl.u32 %v363, 7
      %v365 = vsub.s32 4, %v364
      %v366 = vrot.slane %v315, %v365
      %v367 = vlaneseq
      %v368 = vshrl.u32 %v367, 7
      %v369 = vsub.s32 0, %v368
      %v370 = vrot.slane %v316, %v369
      %v371 = vlaneseq
      %v372 = vshrl.u32 %v371, 7
      %v373 = vsub.s32 4, %v372
      %v374 = vrot.slane %v316, %v373
      %v375 = vlaneseq
      %v376 = vshrl.u32 %v375, 7
      %v377 = vsub.s32 0, %v376
      %v378 = vrot.slane %v317, %v377
      %v379 = vlaneseq
      %v380 = vshrl.u32 %v379, 7
      %v381 = vsub.s32 4, %v380
      %v382 = vrot.slane %v317, %v381
      %v383 = vlaneseq
      %v384 = vshrl.u32 %v383, 7
      %v385 = vsub.s32 0, %v384
      %v386 = vrot.slane %v318, %v385
      %v387 = vlaneseq
      %v388 = vshrl.u32 %v387, 7
      %v389 = vsub.s32 4, %v388
      %v390 = vrot.slane %v318, %v389
      %v407 = vlaneseq
      %v408 = vshrl.u32 %v407, 7
      %v409 = vsub.s32 0, %v408
      %v410 = vrot.slane %v330, %v409
      %v411 = vlaneseq
      %v412 = vshrl.u32 %v411, 7
      %v413 = vsub.s32 0, %v412
      %v414 = vrot.slane %v334, %v413
      %v415 = vlaneseq
      %v416 = vshrl.u32 %v415, 7
      %v417 = vsub.s32 0, %v416
      %v418 = vrot.slane %v338, %v417
      %v419 = vlaneseq
      %v420 = vshrl.u32 %v419, 7
      %v421 = vsub.s32 0, %v420
      %v422 = vrot.slane %v342, %v421
      %v423 = vlaneseq
      %v424 = vshrl.u32 %v423, 7
      %v425 = vsub.s32 0, %v424
      %v426 = vrot.slane %v346, %v425
      %v427 = vlaneseq
      %v428 = vshrl.u32 %v427, 7
      %v429 = vsub.s32 0, %v428
      %v430 = vrot.slane %v350, %v429
      %v431 = vlaneseq
      %v432 = vshrl.u32 %v431, 7
      %v433 = vsub.s32 0, %v432
      %v434 = vrot.slane %v354, %v433
      %v435 = vlaneseq
      %v436 = vshrl.u32 %v435, 7
      %v437 = vsub.s32 0, %v436
      %v438 = vrot.slane %v358, %v437
      %v439 = vlaneseq
      %v440 = vshrl.u32 %v439, 7
      %v441 = vsub.s32 0, %v440
      %v442 = vrot.slane %v362, %v441
      %v443 = vlaneseq
      %v444 = vshrl.u32 %v443, 7
      %v445 = vsub.s32 0, %v444
      %v446 = vrot.slane %v366, %v445
      %v447 = vlaneseq
      %v448 = vshrl.u32 %v447, 7
      %v449 = vsub.s32 0, %v448
      %v450 = vrot.slane %v370, %v449
      %v451 = vlaneseq
      %v452 = vshrl.u32 %v451, 7
      %v453 = vsub.s32 0, %v452
      %v454 = vrot.slane %v374, %v453
      %v455 = vlaneseq
      %v456 = vshrl.u32 %v455, 7
      %v457 = vsub.s32 0, %v456
      %v458 = vrot.slane %v378, %v457
      %v459 = vlaneseq
      %v460 = vshrl.u32 %v459, 7
      %v461 = vsub.s32 0, %v460
      %v462 = vrot.slane %v382, %v461
      %v463 = vlaneseq
      %v464 = vshrl.u32 %v463, 7
      %v465 = vsub.s32 0, %v464
      %v466 = vrot.slane %v386, %v465
      %v467 = vlaneseq
      %v468 = vshrl.u32 %v467, 7
      %v469 = vsub.s32 0, %v468
      %v470 = vrot.slane %v390, %v469
      %v471 = vmul.f32 %v247, %v410
      %v472 = vmul.f32 %v248, %v414
      %v473 = vmul.f32 %v255, %v418
      %v474 = vmul.f32 %v256, %v422
      %v475 = vmul.f32 %v263, %v426
      %v476 = vmul.f32 %v264, %v430
      %v477 = vmul.f32 %v271, %v434
      %v478 = vmul.f32 %v272, %v438
      %v479 = vmul.f32 %v279, %v442
      %v480 = vmul.f32 %v280, %v446
      %v481 = vmul.f32 %v287, %v450
      %v482 = vmul.f32 %v288, %v454
      %v483 = vmul.f32 %v295, %v458
      %v484 = vmul.f32 %v296, %v462
      %v485 = vmul.f32 %v303, %v466
      %v486 = vmul.f32 %v304, %v470
      %v487 = vlaneseq
      %v488 = vshrl.u32 %v487, 7
      %v489 = vsub.s32 1, %v488
      %v490 = vrot.slane %v311, %v489
      %v491 = vlaneseq
      %v492 = vshrl.u32 %v491, 7
      %v493 = vsub.s32 5, %v492
      %v494 = vrot.slane %v311, %v493
      %v495 = vlaneseq
      %v496 = vshrl.u32 %v495, 7
      %v497 = vsub.s32 1, %v496
      %v498 = vrot.slane %v312, %v497
      %v499 = vlaneseq
      %v500 = vshrl.u32 %v499, 7
      %v501 = vsub.s32 5, %v500
      %v502 = vrot.slane %v312, %v501
      %v503 = vlaneseq
      %v504 = vshrl.u32 %v503, 7
      %v505 = vsub.s32 1, %v504
      %v506 = vrot.slane %v313, %v505
      %v507 = vlaneseq
      %v508 = vshrl.u32 %v507, 7
      %v509 = vsub.s32 5, %v508
      %v510 = vrot.slane %v313, %v509
      %v511 = vlaneseq
      %v512 = vshrl.u32 %v511, 7
      %v513 = vsub.s32 1, %v512
      %v514 = vrot.slane %v314, %v513
      %v515 = vlaneseq
      %v516 = vshrl.u32 %v515, 7
      %v517 = vsub.s32 5, %v516
      %v518 = vrot.slane %v314, %v517
      %v519 = vlaneseq
      %v520 = vshrl.u32 %v519, 7
      %v521 = vsub.s32 1, %v520
      %v522 = vrot.slane %v315, %v521
      %v523 = vlaneseq
      %v524 = vshrl.u32 %v523, 7
      %v525 = vsub.s32 5, %v524
      %v526 = vrot.slane %v315, %v525
      %v527 = vlaneseq
      %v528 = vshrl.u32 %v527, 7
      %v529 = vsub.s32 1, %v528
      %v530 = vrot.slane %v316, %v529
      %v531 = vlaneseq
      %v532 = vshrl.u32 %v531, 7
      %v533 = vsub.s32 5, %v532
      %v534 = vrot.slane %v316, %v533
      %v535 = vlaneseq
      %v536 = vshrl.u32 %v535, 7
      %v537 = vsub.s32 1, %v536
      %v538 = vrot.slane %v317, %v537
      %v539 = vlaneseq
      %v540 = vshrl.u32 %v539, 7
      %v541 = vsub.s32 5, %v540
      %v542 = vrot.slane %v317, %v541
      %v543 = vlaneseq
      %v544 = vshrl.u32 %v543, 7
      %v545 = vsub.s32 1, %v544
      %v546 = vrot.slane %v318, %v545
      %v547 = vlaneseq
      %v548 = vshrl.u32 %v547, 7
      %v549 = vsub.s32 5, %v548
      %v550 = vrot.slane %v318, %v549
      %v567 = vlaneseq
      %v568 = vshrl.u32 %v567, 7
      %v569 = vsub.s32 1, %v568
      %v570 = vrot.slane %v490, %v569
      %v571 = vlaneseq
      %v572 = vshrl.u32 %v571, 7
      %v573 = vsub.s32 1, %v572
      %v574 = vrot.slane %v494, %v573
      %v575 = vlaneseq
      %v576 = vshrl.u32 %v575, 7
      %v577 = vsub.s32 1, %v576
      %v578 = vrot.slane %v498, %v577
      %v579 = vlaneseq
      %v580 = vshrl.u32 %v579, 7
      %v581 = vsub.s32 1, %v580
      %v582 = vrot.slane %v502, %v581
      %v583 = vlaneseq
      %v584 = vshrl.u32 %v583, 7
      %v585 = vsub.s32 1, %v584
      %v586 = vrot.slane %v506, %v585
      %v587 = vlaneseq
      %v588 = vshrl.u32 %v587, 7
      %v589 = vsub.s32 1, %v588
      %v590 = vrot.slane %v510, %v589
      %v591 = vlaneseq
      %v592 = vshrl.u32 %v591, 7
      %v593 = vsub.s32 1, %v592
      %v594 = vrot.slane %v514, %v593
      %v595 = vlaneseq
      %v596 = vshrl.u32 %v595, 7
      %v597 = vsub.s32 1, %v596
      %v598 = vrot.slane %v518, %v597
      %v599 = vlaneseq
      %v600 = vshrl.u32 %v599, 7
      %v601 = vsub.s32 1, %v600
      %v602 = vrot.slane %v522, %v601
      %v603 = vlaneseq
      %v604 = vshrl.u32 %v603, 7
      %v605 = vsub.s32 1, %v604
      %v606 = vrot.slane %v526, %v605
      %v607 = vlaneseq
      %v608 = vshrl.u32 %v607, 7
      %v609 = vsub.s32 1, %v608
      %v610 = vrot.slane %v530, %v609
      %v611 = vlaneseq
      %v612 = vshrl.u32 %v611, 7
      %v613 = vsub.s32 1, %v612
      %v614 = vrot.slane %v534, %v613
      %v615 = vlaneseq
      %v616 = vshrl.u32 %v615, 7
      %v617 = vsub.s32 1, %v616
      %v618 = vrot.slane %v538, %v617
      %v619 = vlaneseq
      %v620 = vshrl.u32 %v619, 7
      %v621 = vsub.s32 1, %v620
      %v622 = vrot.slane %v542, %v621
      %v623 = vlaneseq
      %v624 = vshrl.u32 %v623, 7
      %v625 = vsub.s32 1, %v624
      %v626 = vrot.slane %v546, %v625
      %v627 = vlaneseq
      %v628 = vshrl.u32 %v627, 7
      %v629 = vsub.s32 1, %v628
      %v630 = vrot.slane %v550, %v629
      %v631 = vmul.f32 %v249, %v570
      %v632 = vmul.f32 %v250, %v574
      %v633 = vmul.f32 %v257, %v578
      %v634 = vmul.f32 %v258, %v582
      %v635 = vmul.f32 %v265, %v586
      %v636 = vmul.f32 %v266, %v590
      %v637 = vmul.f32 %v273, %v594
      %v638 = vmul.f32 %v274, %v598
      %v639 = vmul.f32 %v281, %v602
      %v640 = vmul.f32 %v282, %v606
      %v641 = vmul.f32 %v289, %v610
      %v642 = vmul.f32 %v290, %v614
      %v643 = vmul.f32 %v297, %v618
      %v644 = vmul.f32 %v298, %v622
      %v645 = vmul.f32 %v305, %v626
      %v646 = vmul.f32 %v306, %v630
      %v647 = vadd.f32 %v471, %v631
      %v648 = vadd.f32 %v472, %v632
      %v649 = vadd.f32 %v473, %v633
      %v650 = vadd.f32 %v474, %v634
      %v651 = vadd.f32 %v475, %v635
      %v652 = vadd.f32 %v476, %v636
      %v653 = vadd.f32 %v477, %v637
      %v654 = vadd.f32 %v478, %v638
      %v655 = vadd.f32 %v479, %v639
      %v656 = vadd.f32 %v480, %v640
      %v657 = vadd.f32 %v481, %v641
      %v658 = vadd.f32 %v482, %v642
      %v659 = vadd.f32 %v483, %v643
      %v660 = vadd.f32 %v484, %v644
      %v661 = vadd.f32 %v485, %v645
      %v662 = vadd.f32 %v486, %v646
      %v663 = vlaneseq
      %v664 = vshrl.u32 %v663, 7
      %v665 = vsub.s32 2, %v664
      %v666 = vrot.slane %v311, %v665
      %v667 = vlaneseq
      %v668 = vshrl.u32 %v667, 7
      %v669 = vsub.s32 6, %v668
      %v670 = vrot.slane %v311, %v669
      %v671 = vlaneseq
      %v672 = vshrl.u32 %v671, 7
      %v673 = vsub.s32 2, %v672
      %v674 = vrot.slane %v312, %v673
      %v675 = vlaneseq
      %v676 = vshrl.u32 %v675, 7
      %v677 = vsub.s32 6, %v676
      %v678 = vrot.slane %v312, %v677
      %v679 = vlaneseq
      %v680 = vshrl.u32 %v679, 7
      %v681 = vsub.s32 2, %v680
      %v682 = vrot.slane %v313, %v681
      %v683 = vlaneseq
      %v684 = vshrl.u32 %v683, 7
      %v685 = vsub.s32 6, %v684
      %v686 = vrot.slane %v313, %v685
      %v687 = vlaneseq
      %v688 = vshrl.u32 %v687, 7
      %v689 = vsub.s32 2, %v688
      %v690 = vrot.slane %v314, %v689
      %v691 = vlaneseq
      %v692 = vshrl.u32 %v691, 7
      %v693 = vsub.s32 6, %v692
      %v694 = vrot.slane %v314, %v693
      %v695 = vlaneseq
      %v696 = vshrl.u32 %v695, 7
      %v697 = vsub.s32 2, %v696
      %v698 = vrot.slane %v315, %v697
      %v699 = vlaneseq
      %v700 = vshrl.u32 %v699, 7
      %v701 = vsub.s32 6, %v700
      %v702 = vrot.slane %v315, %v701
      %v703 = vlaneseq
      %v704 = vshrl.u32 %v703, 7
      %v705 = vsub.s32 2, %v704
      %v706 = vrot.slane %v316, %v705
      %v707 = vlaneseq
      %v708 = vshrl.u32 %v707, 7
      %v709 = vsub.s32 6, %v708
      %v710 = vrot.slane %v316, %v709
      %v711 = vlaneseq
      %v712 = vshrl.u32 %v711, 7
      %v713 = vsub.s32 2, %v712
      %v714 = vrot.slane %v317, %v713
      %v715 = vlaneseq
      %v716 = vshrl.u32 %v715, 7
      %v717 = vsub.s32 6, %v716
      %v718 = vrot.slane %v317, %v717
      %v719 = vlaneseq
      %v720 = vshrl.u32 %v719, 7
      %v721 = vsub.s32 2, %v720
      %v722 = vrot.slane %v318, %v721
      %v723 = vlaneseq
      %v724 = vshrl.u32 %v723, 7
      %v725 = vsub.s32 6, %v724
      %v726 = vrot.slane %v318, %v725
      %v743 = vlaneseq
      %v744 = vshrl.u32 %v743, 7
      %v745 = vsub.s32 2, %v744
      %v746 = vrot.slane %v666, %v745
      %v747 = vlaneseq
      %v748 = vshrl.u32 %v747, 7
      %v749 = vsub.s32 2, %v748
      %v750 = vrot.slane %v670, %v749
      %v751 = vlaneseq
      %v752 = vshrl.u32 %v751, 7
      %v753 = vsub.s32 2, %v752
      %v754 = vrot.slane %v674, %v753
      %v755 = vlaneseq
      %v756 = vshrl.u32 %v755, 7
      %v757 = vsub.s32 2, %v756
      %v758 = vrot.slane %v678, %v757
      %v759 = vlaneseq
      %v760 = vshrl.u32 %v759, 7
      %v761 = vsub.s32 2, %v760
      %v762 = vrot.slane %v682, %v761
      %v763 = vlaneseq
      %v764 = vshrl.u32 %v763, 7
      %v765 = vsub.s32 2, %v764
      %v766 = vrot.slane %v686, %v765
      %v767 = vlaneseq
      %v768 = vshrl.u32 %v767, 7
      %v769 = vsub.s32 2, %v768
      %v770 = vrot.slane %v690, %v769
      %v771 = vlaneseq
      %v772 = vshrl.u32 %v771, 7
      %v773 = vsub.s32 2, %v772
      %v774 = vrot.slane %v694, %v773
      %v775 = vlaneseq
      %v776 = vshrl.u32 %v775, 7
      %v777 = vsub.s32 2, %v776
      %v778 = vrot.slane %v698, %v777
      %v779 = vlaneseq
      %v780 = vshrl.u32 %v779, 7
      %v781 = vsub.s32 2, %v780
      %v782 = vrot.slane %v702, %v781
      %v783 = vlaneseq
      %v784 = vshrl.u32 %v783, 7
      %v785 = vsub.s32 2, %v784
      %v786 = vrot.slane %v706, %v785
      %v787 = vlaneseq
      %v788 = vshrl.u32 %v787, 7
      %v789 = vsub.s32 2, %v788
      %v790 = vrot.slane %v710, %v789
      %v791 = vlaneseq
      %v792 = vshrl.u32 %v791, 7
      %v793 = vsub.s32 2, %v792
      %v794 = vrot.slane %v714, %v793
      %v795 = vlaneseq
      %v796 = vshrl.u32 %v795, 7
      %v797 = vsub.s32 2, %v796
      %v798 = vrot.slane %v718, %v797
      %v799 = vlaneseq
      %v800 = vshrl.u32 %v799, 7
      %v801 = vsub.s32 2, %v800
      %v802 = vrot.slane %v722, %v801
      %v803 = vlaneseq
      %v804 = vshrl.u32 %v803, 7
      %v805 = vsub.s32 2, %v804
      %v806 = vrot.slane %v726, %v805
      %v807 = vmul.f32 %v251, %v746
      %v808 = vmul.f32 %v252, %v750
      %v809 = vmul.f32 %v259, %v754
      %v810 = vmul.f32 %v260, %v758
      %v811 = vmul.f32 %v267, %v762
      %v812 = vmul.f32 %v268, %v766
      %v813 = vmul.f32 %v275, %v770
      %v814 = vmul.f32 %v276, %v774
      %v815 = vmul.f32 %v283, %v778
      %v816 = vmul.f32 %v284, %v782
      %v817 = vmul.f32 %v291, %v786
      %v818 = vmul.f32 %v292, %v790
      %v819 = vmul.f32 %v299, %v794
      %v820 = vmul.f32 %v300, %v798
      %v821 = vmul.f32 %v307, %v802
      %v822 = vmul.f32 %v308, %v806
      %v823 = vadd.f32 %v647, %v807
      %v824 = vadd.f32 %v648, %v808
      %v825 = vadd.f32 %v649, %v809
      %v826 = vadd.f32 %v650, %v810
      %v827 = vadd.f32 %v651, %v811
      %v828 = vadd.f32 %v652, %v812
      %v829 = vadd.f32 %v653, %v813
      %v830 = vadd.f32 %v654, %v814
      %v831 = vadd.f32 %v655, %v815
      %v832 = vadd.f32 %v656, %v816
      %v833 = vadd.f32 %v657, %v817
      %v834 = vadd.f32 %v658, %v818
      %v835 = vadd.f32 %v659, %v819
      %v836 = vadd.f32 %v660, %v820
      %v837 = vadd.f32 %v661, %v821
      %v838 = vadd.f32 %v662, %v822
      %v839 = vlaneseq
      %v840 = vshrl.u32 %v839, 7
      %v841 = vsub.s32 3, %v840
      %v842 = vrot.slane %v311, %v841
      %v843 = vlaneseq
      %v844 = vshrl.u32 %v843, 7
      %v845 = vsub.s32 7, %v844
      %v846 = vrot.slane %v311, %v845
      %v847 = vlaneseq
      %v848 = vshrl.u32 %v847, 7
      %v849 = vsub.s32 3, %v848
      %v850 = vrot.slane %v312, %v849
      %v851 = vlaneseq
      %v852 = vshrl.u32 %v851, 7
      %v853 = vsub.s32 7, %v852
      %v854 = vrot.slane %v312, %v853
      %v855 = vlaneseq
      %v856 = vshrl.u32 %v855, 7
      %v857 = vsub.s32 3, %v856
      %v858 = vrot.slane %v313, %v857
      %v859 = vlaneseq
      %v860 = vshrl.u32 %v859, 7
      %v861 = vsub.s32 7, %v860
      %v862 = vrot.slane %v313, %v861
      %v863 = vlaneseq
      %v864 = vshrl.u32 %v863, 7
      %v865 = vsub.s32 3, %v864
      %v866 = vrot.slane %v314, %v865
      %v867 = vlaneseq
      %v868 = vshrl.u32 %v867, 7
      %v869 = vsub.s32 7, %v868
      %v870 = vrot.slane %v314, %v869
      %v871 = vlaneseq
      %v872 = vshrl.u32 %v871, 7
      %v873 = vsub.s32 3, %v872
      %v874 = vrot.slane %v315, %v873
      %v875 = vlaneseq
      %v876 = vshrl.u32 %v875, 7
      %v877 = vsub.s32 7, %v876
      %v878 = vrot.slane %v315, %v877
      %v879 = vlaneseq
      %v880 = vshrl.u32 %v879, 7
      %v881 = vsub.s32 3, %v880
      %v882 = vrot.slane %v316, %v881
      %v883 = vlaneseq
      %v884 = vshrl.u32 %v883, 7
      %v885 = vsub.s32 7, %v884
      %v886 = vrot.slane %v316, %v885
      %v887 = vlaneseq
      %v888 = vshrl.u32 %v887, 7
      %v889 = vsub.s32 3, %v888
      %v890 = vrot.slane %v317, %v889
      %v891 = vlaneseq
      %v892 = vshrl.u32 %v891, 7
      %v893 = vsub.s32 7, %v892
      %v894 = vrot.slane %v317, %v893
      %v895 = vlaneseq
      %v896 = vshrl.u32 %v895, 7
      %v897 = vsub.s32 3, %v896
      %v898 = vrot.slane %v318, %v897
      %v899 = vlaneseq
      %v900 = vshrl.u32 %v899, 7
      %v901 = vsub.s32 7, %v900
      %v902 = vrot.slane %v318, %v901
      %v919 = vlaneseq
      %v920 = vshrl.u32 %v919, 7
      %v921 = vsub.s32 3, %v920
      %v922 = vrot.slane %v842, %v921
      %v923 = vlaneseq
      %v924 = vshrl.u32 %v923, 7
      %v925 = vsub.s32 3, %v924
      %v926 = vrot.slane %v846, %v925
      %v927 = vlaneseq
      %v928 = vshrl.u32 %v927, 7
      %v929 = vsub.s32 3, %v928
      %v930 = vrot.slane %v850, %v929
      %v931 = vlaneseq
      %v932 = vshrl.u32 %v931, 7
      %v933 = vsub.s32 3, %v932
      %v934 = vrot.slane %v854, %v933
      %v935 = vlaneseq
      %v936 = vshrl.u32 %v935, 7
      %v937 = vsub.s32 3, %v936
      %v938 = vrot.slane %v858, %v937
      %v939 = vlaneseq
      %v940 = vshrl.u32 %v939, 7
      %v941 = vsub.s32 3, %v940
      %v942 = vrot.slane %v862, %v941
      %v943 = vlaneseq
      %v944 = vshrl.u32 %v943, 7
      %v945 = vsub.s32 3, %v944
      %v946 = vrot.slane %v866, %v945
      %v947 = vlaneseq
      %v948 = vshrl.u32 %v947, 7
      %v949 = vsub.s32 3, %v948
      %v950 = vrot.slane %v870, %v949
      %v951 = vlaneseq
      %v952 = vshrl.u32 %v951, 7
      %v953 = vsub.s32 3, %v952
      %v954 = vrot.slane %v874, %v953
      %v955 = vlaneseq
      %v956 = vshrl.u32 %v955, 7
      %v957 = vsub.s32 3, %v956
      %v958 = vrot.slane %v878, %v957
      %v959 = vlaneseq
      %v960 = vshrl.u32 %v959, 7
      %v961 = vsub.s32 3, %v960
      %v962 = vrot.slane %v882, %v961
      %v963 = vlaneseq
      %v964 = vshrl.u32 %v963, 7
      %v965 = vsub.s32 3, %v964
      %v966 = vrot.slane %v886, %v965
      %v967 = vlaneseq
      %v968 = vshrl.u32 %v967, 7
      %v969 = vsub.s32 3, %v968
      %v970 = vrot.slane %v890, %v969
      %v971 = vlaneseq
      %v972 = vshrl.u32 %v971, 7
      %v973 = vsub.s32 3, %v972
      %v974 = vrot.slane %v894, %v973
      %v975 = vlaneseq
      %v976 = vshrl.u32 %v975, 7
      %v977 = vsub.s32 3, %v976
      %v978 = vrot.slane %v898, %v977
      %v979 = vlaneseq
      %v980 = vshrl.u32 %v979, 7
      %v981 = vsub.s32 3, %v980
      %v982 = vrot.slane %v902, %v981
      %v983 = vmul.f32 %v253, %v922
      %v984 = vmul.f32 %v254, %v926
      %v985 = vmul.f32 %v261, %v930
      %v986 = vmul.f32 %v262, %v934
      %v987 = vmul.f32 %v269, %v938
      %v988 = vmul.f32 %v270, %v942
      %v989 = vmul.f32 %v277, %v946
      %v990 = vmul.f32 %v278, %v950
      %v991 = vmul.f32 %v285, %v954
      %v992 = vmul.f32 %v286, %v958
      %v993 = vmul.f32 %v293, %v962
      %v994 = vmul.f32 %v294, %v966
      %v995 = vmul.f32 %v301, %v970
      %v996 = vmul.f32 %v302, %v974
      %v997 = vmul.f32 %v309, %v978
      %v998 = vmul.f32 %v310, %v982
      %v999 = vadd.f32 %v823, %v983
      %v1000 = vadd.f32 %v824, %v984
      %v1001 = vadd.f32 %v825, %v985
      %v1002 = vadd.f32 %v826, %v986
      %v1003 = vadd.f32 %v827, %v987
      %v1004 = vadd.f32 %v828, %v988
      %v1005 = vadd.f32 %v829, %v989
      %v1006 = vadd.f32 %v830, %v990
      %v1007 = vadd.f32 %v831, %v991
      %v1008 = vadd.f32 %v832, %v992
      %v1009 = vadd.f32 %v833, %v993
      %v1010 = vadd.f32 %v834, %v994
      %v1011 = vadd.f32 %v835, %v995
      %v1012 = vadd.f32 %v836, %v996
      %v1013 = vadd.f32 %v837, %v997
      %v1014 = vadd.f32 %v838, %v998
      %v1015 = vpack.c.bf16 %v999, %v999
      %v1016 = vpack.c.bf16 %v1000, %v1000
      %v1017 = vpack.c.bf16 %v1001, %v1001
      %v1018 = vpack.c.bf16 %v1002, %v1002
      %v1019 = vpack.c.bf16 %v1003, %v1003
      %v1020 = vpack.c.bf16 %v1004, %v1004
      %v1021 = vpack.c.bf16 %v1005, %v1005
      %v1022 = vpack.c.bf16 %v1006, %v1006
      %v1023 = vpack.c.bf16 %v1007, %v1007
      %v1024 = vpack.c.bf16 %v1008, %v1008
      %v1025 = vpack.c.bf16 %v1009, %v1009
      %v1026 = vpack.c.bf16 %v1010, %v1010
      %v1027 = vpack.c.bf16 %v1011, %v1011
      %v1028 = vpack.c.bf16 %v1012, %v1012
      %v1029 = vpack.c.bf16 %v1013, %v1013
      %v1030 = vpack.c.bf16 %v1014, %v1014
      %v1047 = vunpack.c.l.b16 %v1015
      %v1048 = vunpack.c.l.b16 %v1016
      %v1049 = vunpack.c.l.b16 %v1017
      %v1050 = vunpack.c.l.b16 %v1018
      %v1051 = vunpack.c.l.b16 %v1019
      %v1052 = vunpack.c.l.b16 %v1020
      %v1053 = vunpack.c.l.b16 %v1021
      %v1054 = vunpack.c.l.b16 %v1022
      %v1055 = vunpack.c.l.b16 %v1023
      %v1056 = vunpack.c.l.b16 %v1024
      %v1057 = vunpack.c.l.b16 %v1025
      %v1058 = vunpack.c.l.b16 %v1026
      %v1059 = vunpack.c.l.b16 %v1027
      %v1060 = vunpack.c.l.b16 %v1028
      %v1061 = vunpack.c.l.b16 %v1029
      %v1062 = vunpack.c.l.b16 %v1030
      %v1063 = vpack.c.b16 %v1048, %v1047
      %v1064 = vpack.c.b16 %v1050, %v1049
      %v1065 = vpack.c.b16 %v1052, %v1051
      %v1066 = vpack.c.b16 %v1054, %v1053
      %v1067 = vpack.c.b16 %v1056, %v1055
      %v1068 = vpack.c.b16 %v1058, %v1057
      %v1069 = vpack.c.b16 %v1060, %v1059
      %v1070 = vpack.c.b16 %v1062, %v1061
      %1079 = vst [vmem:[%s209] sm:$0xff] %v1063
      %1080 = vst [vmem:[%s209 + $0x8] sm:$0xff] %v1064
      %1081 = vst [vmem:[%s209 + $0x10] sm:$0xff] %v1065
      %1082 = vst [vmem:[%s209 + $0x18] sm:$0xff] %v1066
      %1083 = vst [vmem:[%s209 + $0x20] sm:$0xff] %v1067
      %1084 = vst [vmem:[%s209 + $0x28] sm:$0xff] %v1068
      %1085 = vst [vmem:[%s209 + $0x30] sm:$0xff] %v1069
      %1086 = vst [vmem:[%s209 + $0x38] sm:$0xff] %v1070
      %v1087 = vadd.f32 %v999, %v1000
      %1088 = vadd.xlane.f32.xlu0 %v1087
      %v1089 = vpop.xlane.xlu0 %1088
      %v1090 = vadd.f32 %v1001, %v1002
      %1091 = vadd.xlane.f32.xlu0 %v1090
      %v1092 = vpop.xlane.xlu0 %1091
      %v1093 = vadd.f32 %v1003, %v1004
      %1094 = vadd.xlane.f32.xlu0 %v1093
      %v1095 = vpop.xlane.xlu0 %1094
      %v1096 = vadd.f32 %v1005, %v1006
      %1097 = vadd.xlane.f32.xlu0 %v1096
      %v1098 = vpop.xlane.xlu0 %1097
      %v1099 = vadd.f32 %v1007, %v1008
      %1100 = vadd.xlane.f32.xlu0 %v1099
      %v1101 = vpop.xlane.xlu0 %1100
      %v1102 = vadd.f32 %v1009, %v1010
      %1103 = vadd.xlane.f32.xlu0 %v1102
      %v1104 = vpop.xlane.xlu0 %1103
      %v1105 = vadd.f32 %v1011, %v1012
      %1106 = vadd.xlane.f32.xlu0 %v1105
      %v1107 = vpop.xlane.xlu0 %1106
      %v1108 = vadd.f32 %v1013, %v1014
      %1109 = vadd.xlane.f32.xlu0 %v1108
      %v1110 = vpop.xlane.xlu0 %1109
      %v1111 = vrcp.pop 256.0
      %v1112 = vmul.f32 %v1089, %v1111
      %v1113 = vmul.f32 %v1092, %v1111
      %v1114 = vmul.f32 %v1095, %v1111
      %v1115 = vmul.f32 %v1098, %v1111
      %v1116 = vmul.f32 %v1101, %v1111
      %v1117 = vmul.f32 %v1104, %v1111
      %v1118 = vmul.f32 %v1107, %v1111
      %v1119 = vmul.f32 %v1110, %v1111
      %v1128 = vlaneseq
      %v1129 = vand.u32 %v1128, 127
      %v1130 = vlaneseq
      %v1131 = vshrl.u32 %v1130, 7
      %v1132 = vsub.s32 %v1129, %v1131
      %v1133 = vrot.slane %v1112, %v1132
      %v1134 = vlaneseq
      %v1135 = vshrl.u32 %v1134, 7
      %v1136 = vsub.s32 %v1129, %v1135
      %v1137 = vrot.slane %v1113, %v1136
      %v1138 = vlaneseq
      %v1139 = vshrl.u32 %v1138, 7
      %v1140 = vsub.s32 %v1129, %v1139
      %v1141 = vrot.slane %v1114, %v1140
      %v1142 = vlaneseq
      %v1143 = vshrl.u32 %v1142, 7
      %v1144 = vsub.s32 %v1129, %v1143
      %v1145 = vrot.slane %v1115, %v1144
      %v1146 = vlaneseq
      %v1147 = vshrl.u32 %v1146, 7
      %v1148 = vsub.s32 %v1129, %v1147
      %v1149 = vrot.slane %v1116, %v1148
      %v1150 = vlaneseq
      %v1151 = vshrl.u32 %v1150, 7
      %v1152 = vsub.s32 %v1129, %v1151
      %v1153 = vrot.slane %v1117, %v1152
      %v1154 = vlaneseq
      %v1155 = vshrl.u32 %v1154, 7
      %v1156 = vsub.s32 %v1129, %v1155
      %v1157 = vrot.slane %v1118, %v1156
      %v1158 = vlaneseq
      %v1159 = vshrl.u32 %v1158, 7
      %v1160 = vsub.s32 %v1129, %v1159
      %v1161 = vrot.slane %v1119, %v1160
      %vm1162 = vcmask 1041409
      %v1163 = vsel %vm1162, %v1137, %v1133
      %vm1164 = vcmask 1042434
      %v1165 = vsel %vm1164, %v1141, %v1163
      %vm1166 = vcmask 1043459
      %v1167 = vsel %vm1166, %v1145, %v1165
      %vm1168 = vcmask 1044484
      %v1169 = vsel %vm1168, %v1149, %v1167
      %vm1170 = vcmask 1045509
      %v1171 = vsel %vm1170, %v1153, %v1169
      %vm1172 = vcmask 1046534
      %v1173 = vsel %vm1172, %v1157, %v1171
      %vm1174 = vcmask 1047559
      %v1175 = vsel %vm1174, %v1161, %v1173
      %vm1177 = vcmask 64512
      %1178 = vst.msk [vmem:[%s214] sm:$0xff] %vm1177, %v1175
      %s1179 = smul.u32 8, %s15
      %p1180 = scmp.lt.s32.totalorder %s1179, 15
      %s1181 = scalar_select %p1180, %s1179, 15
      %s1182 = smul.addr %s1181, 2
      %s1183 = smul.addr %s1182, 4
      %s1184 = scalar_lea.vmem %s2, %s1183
      %p1185 = scmp.lt.s32.totalorder %s15, 1
      %s1186 = scalar_select %p1185, %s15, 1
      %s1187 = smul.addr %s1186, 8
      %s1188 = scalar_lea.vmem %s3, %s1187
      // Predicated region
      $region29: #{feature_net_forward.4} parent=27 // pred_check
        %p1189 = pneg %p85
      $region30: #{feature_net_forward.4} parent=27 // pred_check_branch
        %1191 = sbr.rel (%p1189) target = $region32
      $region31: #{feature_net_forward.4} parent=27 // pred_region
        %s1192 = smul.u32 8, %s15
      $region32: #{feature_net_forward.4} parent=27 // pred_fallthru
        _
      // Predicated region
      $region33: #{feature_net_forward.4} parent=27 // pred_check
        %p1193 = pneg %p111
      $region34: #{feature_net_forward.4} parent=27 // pred_check_branch
        %1195 = sbr.rel (%p1193) target = $region36
      $region35: #{feature_net_forward.4} parent=27 // pred_region
        _
      $region36: #{feature_net_forward.4} parent=27 // pred_fallthru
        _
    $region28: #{feature_net_forward.4} parent=5 // pred_fallthru
      _
    %p1196 = scmp.le.s32.totalorder 2, %s10
    // Predicated region
    $region37: #{feature_net_forward.4} parent=5 // pred_check
      %p1197 = pneg %p1196
    $region38: #{feature_net_forward.4} parent=5 // pred_check_branch
      %1199 = sbr.rel (%p1197) target = $region40
    $region39: #{feature_net_forward.4} parent=5 // pred_region
      %s1200 = ssub.s32 %s10, 2
      // Predicated region
      $region41: #{feature_net_forward.4} parent=39 // pred_check
        %p1201 = pneg %p91
      $region42: #{feature_net_forward.4} parent=39 // pred_check_branch
        %1203 = sbr.rel (%p1201) target = $region44
      $region43: #{feature_net_forward.4} parent=39 // pred_region
        %s1204 = smul.u32 8, %s16
        %p1205 = scmp.lt.s32.totalorder %s1204, 15
        %s1206 = scalar_select %p1205, %s1204, 15
        %s1207 = smul.addr %s1206, 2
        %s1208 = smul.addr %s1207, 4
        %s1209 = scalar_lea.vmem %s2, %s1208
      $region44: #{feature_net_forward.4} parent=39 // pred_fallthru
        _
      // Predicated region
      $region45: #{feature_net_forward.4} parent=39 // pred_check
        %p1210 = pneg %p117
      $region46: #{feature_net_forward.4} parent=39 // pred_check_branch
        %1212 = sbr.rel (%p1210) target = $region48
      $region47: #{feature_net_forward.4} parent=39 // pred_region
        %p1213 = scmp.lt.s32.totalorder %s16, 1
        %s1214 = scalar_select %p1213, %s16, 1
        %s1215 = smul.addr %s1214, 8
        %s1216 = scalar_lea.vmem %s3, %s1215
      $region48: #{feature_net_forward.4} parent=39 // pred_fallthru
        _
    $region40: #{feature_net_forward.4} parent=5 // pred_fallthru
      _
  $region6: #{feature_net_forward.4} parent=0 // loop_footer
    %s14 = sadd.s32 1, %s10
  $region7: #{feature_net_forward.4} parent=0 // loop_footer_branch
    %9 = sbr.rel target = $region3
  $region8: #{feature_net_forward.4} parent=0 // loop_exit
    _

</llo_original>
